<compile_context>
chip_gen: v7x
topology: tpu7x:2x2x1
jax: 0.10.0
libtpu: 0.0.40
codegen_flags: <defaults>
</compile_context>

<pallas_src>
import jax
import jax.numpy as jnp
from jax.experimental import pallas as pl
from jax.experimental.pallas import tpu as pltpu

EPS = 1e-5
N_PAD = 128  # lane-dense output width; real out_dim is sliced off in the wrapper


def head_kernel(x_ref, w1_ref, b1_ref, w2_ref, b2_ref, w3_ref, b3_ref,
                wo_ref, bo_ref, o_ref):
    # Pool over the sequence axis first (exact: mean commutes with the affine dense1).
    inv_s = 1.0 / x_ref.shape[1]
    x_mean = jnp.sum(x_ref[...], axis=1) * inv_s                 # (TB, D_in), f32

    # dense1 + bn1 (folded) + relu      (dropout1 p=0.5: identity in eval mode)
    h = jnp.dot(x_mean.astype(jnp.bfloat16), w1_ref[...],
                preferred_element_type=jnp.float32) + b1_ref[...]
    h = jnp.maximum(h, 0.0)

    # dense2 + bn2 (folded) + relu      (dropout1 again: identity in eval mode)
    h = jnp.dot(h.astype(jnp.bfloat16), w2_ref[...],
                preferred_element_type=jnp.float32) + b2_ref[...]
    h = jnp.maximum(h, 0.0)

    # dense3 + bn3 (folded) + relu      (dropout2 p=0.2: identity in eval mode)
    h = jnp.dot(h.astype(jnp.bfloat16), w3_ref[...],
                preferred_element_type=jnp.float32) + b3_ref[...]
    h = jnp.maximum(h, 0.0)

    # out_proj, padded to 128 output lanes for an unmasked store.
    o_ref[...] = jnp.dot(h.astype(jnp.bfloat16), wo_ref[...],
                         preferred_element_type=jnp.float32) + bo_ref[...]


def _fold_bn(w, b, g, be, m, v):
    """Fold eval-mode BatchNorm1d into the preceding Linear. Returns (bf16 W', f32 b')."""
    s = g * jax.lax.rsqrt(v + EPS)                # (1, H)
    w_f = (w * s).astype(jnp.bfloat16)            # (D, H) bf16 for the MXU / half DMA
    b_f = (b - m) * s + be                        # (1, H) f32 epilogue bias
    return w_f, b_f


def classification_head_forward(x, params):
    B, S, D_in = x.shape
    out_dim = params["wo"].shape[1]
    H1 = params["w1"].shape[1]
    H2 = params["w2"].shape[1]
    H3 = params["w3"].shape[1]

    # Fold BN into the linears (free in eval mode; done once at trace time).
    w1, b1 = _fold_bn(params["w1"], params["b1"], params["g1"], params["be1"],
                      params["m1"], params["v1"])
    w2, b2 = _fold_bn(params["w2"], params["b2"], params["g2"], params["be2"],
                      params["m2"], params["v2"])
    w3, b3 = _fold_bn(params["w3"], params["b3"], params["g3"], params["be3"],
                      params["m3"], params["v3"])
    # Pad out_proj to a lane-dense 128-wide output slab.
    wo = jnp.zeros((H3, N_PAD), jnp.float32).at[:, :out_dim].set(params["wo"])
    wo = wo.astype(jnp.bfloat16)
    bo = jnp.zeros((1, N_PAD), jnp.float32).at[:, :out_dim].set(params["bo"])

    # Batch tiling: sublane-aligned tile, padded batch, parallel grid axis.
    TB = min(128, ((B + 7) // 8) * 8)
    B_pad = ((B + TB - 1) // TB) * TB
    if B_pad != B:
        x = jnp.pad(x, ((0, B_pad - B), (0, 0), (0, 0)))
    grid = (B_pad // TB,)

    full2d = lambda i: (0, 0)
    in_specs = [
        pl.BlockSpec((TB, S, D_in), lambda i: (i, 0, 0)),   # x batch tile
        pl.BlockSpec(w1.shape, full2d), pl.BlockSpec(b1.shape, full2d),
        pl.BlockSpec(w2.shape, full2d), pl.BlockSpec(b2.shape, full2d),
        pl.BlockSpec(w3.shape, full2d), pl.BlockSpec(b3.shape, full2d),
        pl.BlockSpec(wo.shape, full2d), pl.BlockSpec(bo.shape, full2d),
    ]
    out_spec = pl.BlockSpec((TB, N_PAD), lambda i: (i, 0))

    matmul_flops = 2 * B_pad * (D_in * H1 + H1 * H2 + H2 * H3 + H3 * N_PAD)
    mean_flops = B_pad * S * D_in
    bytes_accessed = (B_pad * S * D_in * 4                     # x (f32)
                      + (D_in * H1 + H1 * H2 + H2 * H3 + H3 * N_PAD) * 2   # bf16 weights
                      + (H1 + H2 + H3 + N_PAD) * 4             # f32 biases
                      + B_pad * N_PAD * 4)                     # output

    out = pl.pallas_call(
        head_kernel,
        out_shape=jax.ShapeDtypeStruct((B_pad, N_PAD), jnp.float32),
        grid_spec=pltpu.PrefetchScalarGridSpec(
            num_scalar_prefetch=0,
            grid=grid,
            in_specs=in_specs,
            out_specs=out_spec,
        ),
        compiler_params=pltpu.CompilerParams(
            dimension_semantics=("parallel",),
            vmem_limit_bytes=32 * 1024 * 1024,
        ),
        cost_estimate=pl.CostEstimate(
            flops=matmul_flops + mean_flops,
            transcendentals=0,
            bytes_accessed=bytes_accessed,
        ),
    )(x, w1, b1, w2, b2, w3, b3, wo, bo)

    return out[:B, :out_dim]


# ----------------------------------------------------------------------------
# References for correctness checking.
# ----------------------------------------------------------------------------
def _bn(x, gamma, beta, mean, var):
    return (x - mean) * jax.lax.rsqrt(var + EPS) * gamma + beta


def _reference_forward_f32(x, params):
    # Exact torch op order (eval mode), full f32: dense1 per token, then mean.
    h = jnp.einsum("bsd,dh->bsh", x, params["w1"]) + params["b1"]
    h = jnp.mean(h, axis=1)
    h = jnp.maximum(_bn(h, params["g1"], params["be1"], params["m1"], params["v1"]), 0.0)
    h = h @ params["w2"] + params["b2"]
    h = jnp.maximum(_bn(h, params["g2"], params["be2"], params["m2"], params["v2"]), 0.0)
    h = h @ params["w3"] + params["b3"]
    h = jnp.maximum(_bn(h, params["g3"], params["be3"], params["m3"], params["v3"]), 0.0)
    return h @ params["wo"] + params["bo"]


def _reference_forward_matched(x, params):
    # Same numerics as the kernel: pool-first, folded BN, bf16 matmul inputs, f32 accum.
    w1, b1 = _fold_bn(params["w1"], params["b1"], params["g1"], params["be1"],
                      params["m1"], params["v1"])
    w2, b2 = _fold_bn(params["w2"], params["b2"], params["g2"], params["be2"],
                      params["m2"], params["v2"])
    w3, b3 = _fold_bn(params["w3"], params["b3"], params["g3"], params["be3"],
                      params["m3"], params["v3"])
    h = jnp.mean(x, axis=1)
    h = jnp.maximum(jnp.dot(h.astype(jnp.bfloat16), w1,
                            preferred_element_type=jnp.float32) + b1, 0.0)
    h = jnp.maximum(jnp.dot(h.astype(jnp.bfloat16), w2,
                            preferred_element_type=jnp.float32) + b2, 0.0)
    h = jnp.maximum(jnp.dot(h.astype(jnp.bfloat16), w3,
                            preferred_element_type=jnp.float32) + b3, 0.0)
    return (jnp.dot(h.astype(jnp.bfloat16), params["wo"].astype(jnp.bfloat16),
                    preferred_element_type=jnp.float32) + params["bo"])


def make_params(key, input_dim, h1=768, h2=512, h3=128, out_dim=3):
    ks = jax.random.split(key, 16)

    def lin(kw, kb, fan_in, fan_out):
        bound = 1.0 / jnp.sqrt(fan_in)
        w = jax.random.uniform(kw, (fan_in, fan_out), jnp.float32, -bound, bound)
        b = jax.random.uniform(kb, (1, fan_out), jnp.float32, -bound, bound)
        return w, b

    def bn(kg, kb, km, kv, dim):
        g = jax.random.uniform(kg, (1, dim), jnp.float32, 0.5, 1.5)
        be = jax.random.uniform(kb, (1, dim), jnp.float32, -0.5, 0.5)
        m = jax.random.uniform(km, (1, dim), jnp.float32, -0.2, 0.2)
        v = jax.random.uniform(kv, (1, dim), jnp.float32, 0.5, 1.5)
        return g, be, m, v

    w1, b1 = lin(ks[0], ks[1], input_dim, h1)
    g1, be1, m1, v1 = bn(ks[2], ks[3], ks[4], ks[5], h1)
    w2, b2 = lin(ks[6], ks[7], h1, h2)
    g2, be2, m2, v2 = bn(ks[8], ks[9], ks[10], ks[11], h2)
    w3, b3 = lin(ks[12], ks[13], h2, h3)
    g3, be3, m3, v3 = bn(ks[14], ks[15], ks[0], ks[1], h3)  # reuse keys deterministically
    wo, bo = lin(ks[2], ks[3], h3, out_dim)

    return dict(w1=w1, b1=b1, g1=g1, be1=be1, m1=m1, v1=v1,
                w2=w2, b2=b2, g2=g2, be2=be2, m2=m2, v2=v2,
                w3=w3, b3=b3, g3=g3, be3=be3, m3=m3, v3=v3,
                wo=wo, bo=bo)


if __name__ == "__main__":
    B, S, D_in = 2, 8, 32
    key = jax.random.PRNGKey(0)
    kx, kp = jax.random.split(key)

    x = jax.random.normal(kx, (B, S, D_in), dtype=jnp.float32)
    params = make_params(kp, D_in)

    out = classification_head_forward(x, params)
    out = jax.block_until_ready(out)
    assert out.shape == (B, 3), out.shape

    # Primary check: kernel vs a pure-JAX reference with identical numerics
    # (pool-first, folded BN, bf16 matmul operands, f32 accumulation).
    matched = _reference_forward_matched(x, params)
    assert jnp.allclose(out, matched, rtol=1e-3, atol=1e-3), "mismatch vs matched reference"

    # Sanity check: semantics vs the exact torch-order full-f32 reference
    # (bf16 weight rounding shifts results slightly; compare in relative L2).
    ref = _reference_forward_f32(x, params)
    rel_err = jnp.linalg.norm(out - ref) / (jnp.linalg.norm(ref) + 1e-8)
    assert rel_err < 5e-2, f"relative error vs f32 reference too large: {rel_err}"

    print("KERNEL_OK")
</pallas_src>

<mosaic_0001>
module attributes {stable_mosaic.version = 11 : i64} {
  func.func @head_kernel(%arg0: i32, %arg1: memref<8x8x32xf32, #tpu.memory_space<vmem>>, %arg2: memref<32x768xbf16, #tpu.memory_space<vmem>>, %arg3: memref<1x768xf32, #tpu.memory_space<vmem>>, %arg4: memref<768x512xbf16, #tpu.memory_space<vmem>>, %arg5: memref<1x512xf32, #tpu.memory_space<vmem>>, %arg6: memref<512x128xbf16, #tpu.memory_space<vmem>>, %arg7: memref<1x128xf32, #tpu.memory_space<vmem>>, %arg8: memref<128x128xbf16, #tpu.memory_space<vmem>>, %arg9: memref<1x128xf32, #tpu.memory_space<vmem>>, %arg10: memref<8x128xf32, #tpu.memory_space<vmem>>) attributes {dimension_semantics = [#tpu.dimension_semantics<parallel>], iteration_bounds = array<i64: 1>, scalar_prefetch = 0 : i64, scratch_operands = 0 : i64, tpu.core_type = #tpu.core_type<tc>, window_params = [{transform_indices = @transform_0, window_bounds = array<i64: 8, 8, 32>}, {pipeline_mode = #tpu.pipeline_mode<synchronous>, transform_indices = @transform_1, window_bounds = array<i64: 32, 768>}, {pipeline_mode = #tpu.pipeline_mode<synchronous>, transform_indices = @transform_2, window_bounds = array<i64: 1, 768>}, {pipeline_mode = #tpu.pipeline_mode<synchronous>, transform_indices = @transform_3, window_bounds = array<i64: 768, 512>}, {pipeline_mode = #tpu.pipeline_mode<synchronous>, transform_indices = @transform_4, window_bounds = array<i64: 1, 512>}, {pipeline_mode = #tpu.pipeline_mode<synchronous>, transform_indices = @transform_5, window_bounds = array<i64: 512, 128>}, {pipeline_mode = #tpu.pipeline_mode<synchronous>, transform_indices = @transform_6, window_bounds = array<i64: 1, 128>}, {pipeline_mode = #tpu.pipeline_mode<synchronous>, transform_indices = @transform_7, window_bounds = array<i64: 128, 128>}, {pipeline_mode = #tpu.pipeline_mode<synchronous>, transform_indices = @transform_8, window_bounds = array<i64: 1, 128>}, {transform_indices = @transform_9, window_bounds = array<i64: 8, 128>}]} {
    %c0 = arith.constant 0 : index
    %c0_0 = arith.constant 0 : index
    %c0_1 = arith.constant 0 : index
    %0 = vector.load %arg1[%c0, %c0_0, %c0_1] : memref<8x8x32xf32, #tpu.memory_space<vmem>>, vector<8x8x32xf32>
    %cst = arith.constant dense<0.000000e+00> : vector<8x32xf32>
    %1 = vector.multi_reduction <add>, %0, %cst [1] : vector<8x8x32xf32> to vector<8x32xf32>
    %cst_2 = arith.constant 1.250000e-01 : f32
    %2 = vector.broadcast %cst_2 : f32 to vector<8x32xf32>
    %3 = arith.mulf %1, %2 : vector<8x32xf32>
    %4 = arith.truncf %3 : vector<8x32xf32> to vector<8x32xbf16>
    %c0_3 = arith.constant 0 : index
    %c0_4 = arith.constant 0 : index
    %5 = vector.load %arg2[%c0_3, %c0_4] : memref<32x768xbf16, #tpu.memory_space<vmem>>, vector<32x768xbf16>
    %cst_5 = arith.constant dense<0.000000e+00> : vector<8x768xf32>
    %6 = tpu.matmul %4, %5, %cst_5 {dimension_numbers = #tpu.dot_dimension_numbers<[1], [0], [0], [1], [0, 0, 1, 1], [], []>} : vector<8x32xbf16>, vector<32x768xbf16>, vector<8x768xf32> -> vector<8x768xf32>
    %c0_6 = arith.constant 0 : index
    %c0_7 = arith.constant 0 : index
    %7 = vector.load %arg3[%c0_6, %c0_7] : memref<1x768xf32, #tpu.memory_space<vmem>>, vector<1x768xf32>
    %8 = vector.broadcast %7 : vector<1x768xf32> to vector<8x768xf32>
    %9 = arith.addf %6, %8 : vector<8x768xf32>
    %cst_8 = arith.constant 0.000000e+00 : f32
    %10 = vector.broadcast %cst_8 : f32 to vector<8x768xf32>
    %11 = arith.maximumf %9, %10 : vector<8x768xf32>
    %12 = arith.truncf %11 : vector<8x768xf32> to vector<8x768xbf16>
    %c0_9 = arith.constant 0 : index
    %c0_10 = arith.constant 0 : index
    %13 = vector.load %arg4[%c0_9, %c0_10] : memref<768x512xbf16, #tpu.memory_space<vmem>>, vector<768x512xbf16>
    %cst_11 = arith.constant dense<0.000000e+00> : vector<8x512xf32>
    %14 = tpu.matmul %12, %13, %cst_11 {dimension_numbers = #tpu.dot_dimension_numbers<[1], [0], [0], [1], [0, 0, 1, 1], [], []>} : vector<8x768xbf16>, vector<768x512xbf16>, vector<8x512xf32> -> vector<8x512xf32>
    %c0_12 = arith.constant 0 : index
    %c0_13 = arith.constant 0 : index
    %15 = vector.load %arg5[%c0_12, %c0_13] : memref<1x512xf32, #tpu.memory_space<vmem>>, vector<1x512xf32>
    %16 = vector.broadcast %15 : vector<1x512xf32> to vector<8x512xf32>
    %17 = arith.addf %14, %16 : vector<8x512xf32>
    %cst_14 = arith.constant 0.000000e+00 : f32
    %18 = vector.broadcast %cst_14 : f32 to vector<8x512xf32>
    %19 = arith.maximumf %17, %18 : vector<8x512xf32>
    %20 = arith.truncf %19 : vector<8x512xf32> to vector<8x512xbf16>
    %c0_15 = arith.constant 0 : index
    %c0_16 = arith.constant 0 : index
    %21 = vector.load %arg6[%c0_15, %c0_16] : memref<512x128xbf16, #tpu.memory_space<vmem>>, vector<512x128xbf16>
    %cst_17 = arith.constant dense<0.000000e+00> : vector<8x128xf32>
    %22 = tpu.matmul %20, %21, %cst_17 {dimension_numbers = #tpu.dot_dimension_numbers<[1], [0], [0], [1], [0, 0, 1, 1], [], []>} : vector<8x512xbf16>, vector<512x128xbf16>, vector<8x128xf32> -> vector<8x128xf32>
    %c0_18 = arith.constant 0 : index
    %c0_19 = arith.constant 0 : index
    %23 = vector.load %arg7[%c0_18, %c0_19] : memref<1x128xf32, #tpu.memory_space<vmem>>, vector<1x128xf32>
    %24 = vector.broadcast %23 : vector<1x128xf32> to vector<8x128xf32>
    %25 = arith.addf %22, %24 : vector<8x128xf32>
    %cst_20 = arith.constant 0.000000e+00 : f32
    %26 = vector.broadcast %cst_20 : f32 to vector<8x128xf32>
    %27 = arith.maximumf %25, %26 : vector<8x128xf32>
    %28 = arith.truncf %27 : vector<8x128xf32> to vector<8x128xbf16>
    %c0_21 = arith.constant 0 : index
    %c0_22 = arith.constant 0 : index
    %29 = vector.load %arg8[%c0_21, %c0_22] : memref<128x128xbf16, #tpu.memory_space<vmem>>, vector<128x128xbf16>
    %cst_23 = arith.constant dense<0.000000e+00> : vector<8x128xf32>
    %30 = tpu.matmul %28, %29, %cst_23 {dimension_numbers = #tpu.dot_dimension_numbers<[1], [0], [0], [1], [0, 0, 1, 1], [], []>} : vector<8x128xbf16>, vector<128x128xbf16>, vector<8x128xf32> -> vector<8x128xf32>
    %c0_24 = arith.constant 0 : index
    %c0_25 = arith.constant 0 : index
    %31 = vector.load %arg9[%c0_24, %c0_25] : memref<1x128xf32, #tpu.memory_space<vmem>>, vector<1x128xf32>
    %32 = vector.broadcast %31 : vector<1x128xf32> to vector<8x128xf32>
    %33 = arith.addf %30, %32 : vector<8x128xf32>
    %c0_26 = arith.constant 0 : index
    %c0_27 = arith.constant 0 : index
    %34 = vector.load %arg10[%c0_26, %c0_27] : memref<8x128xf32, #tpu.memory_space<vmem>>, vector<8x128xf32>
    tpu.vector_store %arg10[%c0_26, %c0_27], %33 {strides = array<i32>} : memref<8x128xf32, #tpu.memory_space<vmem>>, vector<8x128xf32>,
    return
  }
  func.func @transform_0(%arg0: i32) -> (i32, i32, i32) {
    %c0_i32 = arith.constant 0 : i32
    %c0_i32_0 = arith.constant 0 : i32
    %c0_i32_1 = arith.constant 0 : i32
    return %arg0, %c0_i32, %c0_i32_0 : i32, i32, i32
  }
  func.func @transform_1(%arg0: i32) -> (i32, i32) {
    %c0_i32 = arith.constant 0 : i32
    %c0_i32_0 = arith.constant 0 : i32
    %c0_i32_1 = arith.constant 0 : i32
    return %c0_i32, %c0_i32_0 : i32, i32
  }
  func.func @transform_2(%arg0: i32) -> (i32, i32) {
    %c0_i32 = arith.constant 0 : i32
    %c0_i32_0 = arith.constant 0 : i32
    %c0_i32_1 = arith.constant 0 : i32
    return %c0_i32, %c0_i32_0 : i32, i32
  }
  func.func @transform_3(%arg0: i32) -> (i32, i32) {
    %c0_i32 = arith.constant 0 : i32
    %c0_i32_0 = arith.constant 0 : i32
    %c0_i32_1 = arith.constant 0 : i32
    return %c0_i32, %c0_i32_0 : i32, i32
  }
  func.func @transform_4(%arg0: i32) -> (i32, i32) {
    %c0_i32 = arith.constant 0 : i32
    %c0_i32_0 = arith.constant 0 : i32
    %c0_i32_1 = arith.constant 0 : i32
    return %c0_i32, %c0_i32_0 : i32, i32
  }
  func.func @transform_5(%arg0: i32) -> (i32, i32) {
    %c0_i32 = arith.constant 0 : i32
    %c0_i32_0 = arith.constant 0 : i32
    %c0_i32_1 = arith.constant 0 : i32
    return %c0_i32, %c0_i32_0 : i32, i32
  }
  func.func @transform_6(%arg0: i32) -> (i32, i32) {
    %c0_i32 = arith.constant 0 : i32
    %c0_i32_0 = arith.constant 0 : i32
    %c0_i32_1 = arith.constant 0 : i32
    return %c0_i32, %c0_i32_0 : i32, i32
  }
  func.func @transform_7(%arg0: i32) -> (i32, i32) {
    %c0_i32 = arith.constant 0 : i32
    %c0_i32_0 = arith.constant 0 : i32
    %c0_i32_1 = arith.constant 0 : i32
    return %c0_i32, %c0_i32_0 : i32, i32
  }
  func.func @transform_8(%arg0: i32) -> (i32, i32) {
    %c0_i32 = arith.constant 0 : i32
    %c0_i32_0 = arith.constant 0 : i32
    %c0_i32_1 = arith.constant 0 : i32
    return %c0_i32, %c0_i32_0 : i32, i32
  }
  func.func @transform_9(%arg0: i32) -> (i32, i32) {
    %c0_i32 = arith.constant 0 : i32
    %c0_i32_0 = arith.constant 0 : i32
    return %arg0, %c0_i32 : i32, i32
  }
}

</mosaic_0001>

<llo_original>
// kernel: tpu_custom_call.1
$region0: #{tpu_custom_call.1}
  #allocation0 [shape = 'u32[]', space=smem, size = 0x4, offset = 0x4, fixed_abs, tag = 'smem constant byte address 0x4 - core index']
  #allocation1 [shape = 'u32[144,128]{1,0:T(1,128)}', space=vmem, size = 0x12000, scoped, tag = 'internal scratch']
  %s0 = inlined_call_operand.hbm [shape: f32[8,8,32], index: 0, kind: input, shape index: {}]
  %s1 = inlined_call_operand.hbm [shape: bf16[32,768], index: 1, kind: input, shape index: {}]
  %s2 = inlined_call_operand.vmem [shape: f32[1,768], index: 2, kind: input, shape index: {}]
  %s3 = inlined_call_operand.hbm [shape: bf16[768,512], index: 3, kind: input, shape index: {}]
  %s4 = inlined_call_operand.vmem [shape: f32[1,512], index: 4, kind: input, shape index: {}]
  %s5 = inlined_call_operand.hbm [shape: bf16[512,128], index: 5, kind: input, shape index: {}]
  %s6 = inlined_call_operand.vmem [shape: f32[1,128], index: 6, kind: input, shape index: {}]
  %s7 = inlined_call_operand.hbm [shape: bf16[128,128], index: 7, kind: input, shape index: {}]
  %s8 = inlined_call_operand.vmem [shape: f32[1,128], index: 8, kind: input, shape index: {}]
  %s9 = inlined_call_operand.hbm [shape: f32[8,128], index: 9, kind: output, shape index: {}]
  %s10 = sld [smem:[#allocation0]]
  $region66: #{tpu_custom_call.1} parent=0
    _
  %s12 = ssub.s32 1, %s10
  %s13 = scalar_select 0, %s12, %s10
  $region1: #{tpu_custom_call.1} parent=0
    #allocation2 [shape = 'u8[32768]{0}', space=vmem, size = 0x8000, scoped, tag = 'input window, operand 0, single buffered']
    #allocation3 [shape = 's32[1]{0}', space=sflag, size = 0x4, scoped, tag = 'scoped memory for tpu_custom_call.1']
    #allocation4 [shape = 's32[1]{0}', space=sflag, size = 0x4, scoped, tag = 'scoped memory for tpu_custom_call.1']
    #allocation5 [shape = 'u8[49152]{0}', space=vmem, size = 0xc000, scoped, tag = 'input window, operand 1, single buffered']
    #allocation6 [shape = 's32[1]{0}', space=sflag, size = 0x4, scoped, tag = 'scoped memory for tpu_custom_call.1']
    #allocation7 [shape = 'u8[786432]{0}', space=vmem, size = 0xc0000, scoped, tag = 'input window, operand 3, single buffered']
    #allocation8 [shape = 'u8[131072]{0}', space=vmem, size = 0x20000, scoped, tag = 'input window, operand 5, single buffered']
    #allocation9 [shape = 's32[1]{0}', space=sflag, size = 0x4, scoped, tag = 'scoped memory for tpu_custom_call.1']
    #allocation10 [shape = 'u8[32768]{0}', space=vmem, size = 0x8000, scoped, tag = 'input window, operand 7, single buffered']
    #allocation11 [shape = 'u8[4096]{0}', space=vmem, size = 0x1000, scoped, tag = 'output window, operand 0, single buffered']
    %14 = vsyncpa [#allocation3], 0
    %15 = vsyncpa [#allocation6], 0
    %16 = vsyncpa [#allocation9], 0
    %17 = vsyncpa [#allocation4], 0
    // Predicated region
    $region2: #{tpu_custom_call.1} parent=1 // pred_check
      _
    $region3: #{tpu_custom_call.1} parent=1 // pred_check_branch
      %19 = sbr.rel (0) target = $region5
    $region4: #{tpu_custom_call.1} parent=1 // pred_region
      %s21 = ssub.s32 1024, 1024
      %22 = vsyncadd [#allocation3], %s21
      %s23 = sshll.u32 [#allocation2], 4
      %s24 = int_to_ptr.vmem [resolvable:$true] %s23
      %29 = dma.hbm_to_vmem [thread:$0]  %s0, 1024, %s24, [#allocation3], 128, 128, 8
    $region5: #{tpu_custom_call.1} parent=1 // pred_fallthru
      _
    // Predicated region
    $region6: #{tpu_custom_call.1} parent=1 // pred_check
      _
    $region7: #{tpu_custom_call.1} parent=1 // pred_check_branch
      %31 = sbr.rel (0) target = $region9
    $region8: #{tpu_custom_call.1} parent=1 // pred_region
      %s33 = ssub.s32 1536, 1536
      %34 = vsyncadd [#allocation6], %s33
      %s35 = sshll.u32 [#allocation5], 4
      %s36 = int_to_ptr.vmem [resolvable:$true] %s35
      %41 = dma.hbm_to_vmem [thread:$0]  %s1, 1536, %s36, [#allocation6], 384, 384, 24
    $region9: #{tpu_custom_call.1} parent=1 // pred_fallthru
      _
    // Predicated region
    $region10: #{tpu_custom_call.1} parent=1 // pred_check
      _
    $region11: #{tpu_custom_call.1} parent=1 // pred_check_branch
      %43 = sbr.rel (0) target = $region13
    $region12: #{tpu_custom_call.1} parent=1 // pred_region
      _
    $region13: #{tpu_custom_call.1} parent=1 // pred_fallthru
      _
    // Predicated region
    $region14: #{tpu_custom_call.1} parent=1 // pred_check
      _
    $region15: #{tpu_custom_call.1} parent=1 // pred_check_branch
      %45 = sbr.rel (0) target = $region17
    $region16: #{tpu_custom_call.1} parent=1 // pred_region
      %s47 = ssub.s32 24576, 24576
      %48 = vsyncadd [#allocation6], %s47
      %s49 = sshll.u32 [#allocation7], 4
      %s50 = int_to_ptr.vmem [resolvable:$true] %s49
      %55 = dma.hbm_to_vmem [thread:$0]  %s3, 24576, %s50, [#allocation6], 256, 256, 16
    $region17: #{tpu_custom_call.1} parent=1 // pred_fallthru
      _
    // Predicated region
    $region18: #{tpu_custom_call.1} parent=1 // pred_check
      _
    $region19: #{tpu_custom_call.1} parent=1 // pred_check_branch
      %57 = sbr.rel (0) target = $region21
    $region20: #{tpu_custom_call.1} parent=1 // pred_region
      _
    $region21: #{tpu_custom_call.1} parent=1 // pred_fallthru
      _
    // Predicated region
    $region22: #{tpu_custom_call.1} parent=1 // pred_check
      _
    $region23: #{tpu_custom_call.1} parent=1 // pred_check_branch
      %59 = sbr.rel (0) target = $region25
    $region24: #{tpu_custom_call.1} parent=1 // pred_region
      %s61 = ssub.s32 4096, 4096
      %62 = vsyncadd [#allocation9], %s61
      %s63 = sshll.u32 [#allocation8], 4
      %s64 = int_to_ptr.vmem [resolvable:$true] %s63
      %69 = dma.hbm_to_vmem [thread:$0]  %s5, 4096, %s64, [#allocation9], 64, 64, 4
    $region25: #{tpu_custom_call.1} parent=1 // pred_fallthru
      _
    // Predicated region
    $region26: #{tpu_custom_call.1} parent=1 // pred_check
      _
    $region27: #{tpu_custom_call.1} parent=1 // pred_check_branch
      %71 = sbr.rel (0) target = $region29
    $region28: #{tpu_custom_call.1} parent=1 // pred_region
      _
    $region29: #{tpu_custom_call.1} parent=1 // pred_fallthru
      _
    // Predicated region
    $region30: #{tpu_custom_call.1} parent=1 // pred_check
      _
    $region31: #{tpu_custom_call.1} parent=1 // pred_check_branch
      %73 = sbr.rel (0) target = $region33
    $region32: #{tpu_custom_call.1} parent=1 // pred_region
      %s75 = ssub.s32 1024, 1024
      %76 = vsyncadd [#allocation9], %s75
      %s77 = sshll.u32 [#allocation10], 4
      %s78 = int_to_ptr.vmem [resolvable:$true] %s77
      %83 = dma.hbm_to_vmem [thread:$0]  %s7, 1024, %s78, [#allocation9], 64, 64, 4
    $region33: #{tpu_custom_call.1} parent=1 // pred_fallthru
      _
    // Predicated region
    $region34: #{tpu_custom_call.1} parent=1 // pred_check
      _
    $region35: #{tpu_custom_call.1} parent=1 // pred_check_branch
      %85 = sbr.rel (0) target = $region37
    $region36: #{tpu_custom_call.1} parent=1 // pred_region
      _
    $region37: #{tpu_custom_call.1} parent=1 // pred_fallthru
      _
    // Predicated region
    $region38: #{tpu_custom_call.1} parent=1 // pred_check
      _
    $region39: #{tpu_custom_call.1} parent=1 // pred_check_branch
      %87 = sbr.rel (0) target = $region41
    $region40: #{tpu_custom_call.1} parent=1 // pred_region
      %88 = dma.done [#allocation3], 1024
    $region41: #{tpu_custom_call.1} parent=1 // pred_fallthru
      _
    // Predicated region
    $region42: #{tpu_custom_call.1} parent=1 // pred_check
      _
    $region43: #{tpu_custom_call.1} parent=1 // pred_check_branch
      %90 = sbr.rel (0) target = $region45
    $region44: #{tpu_custom_call.1} parent=1 // pred_region
      %91 = dma.done [#allocation6], 1536
    $region45: #{tpu_custom_call.1} parent=1 // pred_fallthru
      _
    // Predicated region
    $region46: #{tpu_custom_call.1} parent=1 // pred_check
      _
    $region47: #{tpu_custom_call.1} parent=1 // pred_check_branch
      %93 = sbr.rel (0) target = $region49
    $region48: #{tpu_custom_call.1} parent=1 // pred_region
      %94 = dma.done [#allocation6], 24576
    $region49: #{tpu_custom_call.1} parent=1 // pred_fallthru
      _
    // Predicated region
    $region50: #{tpu_custom_call.1} parent=1 // pred_check
      _
    $region51: #{tpu_custom_call.1} parent=1 // pred_check_branch
      %96 = sbr.rel (0) target = $region53
    $region52: #{tpu_custom_call.1} parent=1 // pred_region
      %97 = dma.done [#allocation9], 4096
    $region53: #{tpu_custom_call.1} parent=1 // pred_fallthru
      _
    // Predicated region
    $region54: #{tpu_custom_call.1} parent=1 // pred_check
      _
    $region55: #{tpu_custom_call.1} parent=1 // pred_check_branch
      %99 = sbr.rel (0) target = $region57
    $region56: #{tpu_custom_call.1} parent=1 // pred_region
      %100 = dma.done [#allocation9], 1024
    $region57: #{tpu_custom_call.1} parent=1 // pred_fallthru
      _
    %v102 = vld [vmem:[#allocation2] sm:$0xff]
    %v103 = vld [vmem:[#allocation2 + $0x8] sm:$0xff]
    %v104 = vld [vmem:[#allocation2 + $0x10] sm:$0xff]
    %v105 = vld [vmem:[#allocation2 + $0x18] sm:$0xff]
    %v106 = vld [vmem:[#allocation2 + $0x20] sm:$0xff]
    %v107 = vld [vmem:[#allocation2 + $0x28] sm:$0xff]
    %v108 = vld [vmem:[#allocation2 + $0x30] sm:$0xff]
    %v109 = vld [vmem:[#allocation2 + $0x38] sm:$0xff]
    %vm110 = vcmask 261120
    %v111 = vsel %vm110, %v102, 0.0
    %v112 = vrot.slane %v111, 4
    %v113 = vadd.f32 %v111, %v112
    %v114 = vrot.slane %v113, 2
    %v115 = vadd.f32 %v113, %v114
    %v116 = vrot.slane %v115, 1
    %v117 = vadd.f32 %v115, %v116
    %v118 = vsel %vm110, %v103, 0.0
    %v119 = vrot.slane %v118, 4
    %v120 = vadd.f32 %v118, %v119
    %v121 = vrot.slane %v120, 2
    %v122 = vadd.f32 %v120, %v121
    %v123 = vrot.slane %v122, 1
    %v124 = vadd.f32 %v122, %v123
    %v125 = vsel %vm110, %v104, 0.0
    %v126 = vrot.slane %v125, 4
    %v127 = vadd.f32 %v125, %v126
    %v128 = vrot.slane %v127, 2
    %v129 = vadd.f32 %v127, %v128
    %v130 = vrot.slane %v129, 1
    %v131 = vadd.f32 %v129, %v130
    %v132 = vsel %vm110, %v105, 0.0
    %v133 = vrot.slane %v132, 4
    %v134 = vadd.f32 %v132, %v133
    %v135 = vrot.slane %v134, 2
    %v136 = vadd.f32 %v134, %v135
    %v137 = vrot.slane %v136, 1
    %v138 = vadd.f32 %v136, %v137
    %v139 = vsel %vm110, %v106, 0.0
    %v140 = vrot.slane %v139, 4
    %v141 = vadd.f32 %v139, %v140
    %v142 = vrot.slane %v141, 2
    %v143 = vadd.f32 %v141, %v142
    %v144 = vrot.slane %v143, 1
    %v145 = vadd.f32 %v143, %v144
    %v146 = vsel %vm110, %v107, 0.0
    %v147 = vrot.slane %v146, 4
    %v148 = vadd.f32 %v146, %v147
    %v149 = vrot.slane %v148, 2
    %v150 = vadd.f32 %v148, %v149
    %v151 = vrot.slane %v150, 1
    %v152 = vadd.f32 %v150, %v151
    %v153 = vsel %vm110, %v108, 0.0
    %v154 = vrot.slane %v153, 4
    %v155 = vadd.f32 %v153, %v154
    %v156 = vrot.slane %v155, 2
    %v157 = vadd.f32 %v155, %v156
    %v158 = vrot.slane %v157, 1
    %v159 = vadd.f32 %v157, %v158
    %v160 = vsel %vm110, %v109, 0.0
    %v161 = vrot.slane %v160, 4
    %v162 = vadd.f32 %v160, %v161
    %v163 = vrot.slane %v162, 2
    %v164 = vadd.f32 %v162, %v163
    %v165 = vrot.slane %v164, 1
    %v166 = vadd.f32 %v164, %v165
    %v167 = vmul.f32 %v117, 0.125
    %v168 = vmul.f32 %v124, 0.125
    %v169 = vmul.f32 %v131, 0.125
    %v170 = vmul.f32 %v138, 0.125
    %v171 = vmul.f32 %v145, 0.125
    %v172 = vmul.f32 %v152, 0.125
    %v173 = vmul.f32 %v159, 0.125
    %v174 = vmul.f32 %v166, 0.125
    %v175 = vpack.c.bf16 %v167, %v167
    %v176 = vpack.c.bf16 %v168, %v168
    %v177 = vpack.c.bf16 %v169, %v169
    %v178 = vpack.c.bf16 %v170, %v170
    %v179 = vpack.c.bf16 %v171, %v171
    %v180 = vpack.c.bf16 %v172, %v172
    %v181 = vpack.c.bf16 %v173, %v173
    %v182 = vpack.c.bf16 %v174, %v174
    %v183 = vld [vmem:[#allocation5] sm:$0xff]
    %v184 = vld [vmem:[#allocation5 + $0x8] sm:$0xff]
    %v185 = vld [vmem:[#allocation5 + $0x10] sm:$0xff]
    %v186 = vld [vmem:[#allocation5 + $0x18] sm:$0xff]
    %v187 = vld [vmem:[#allocation5 + $0x20] sm:$0xff]
    %v188 = vld [vmem:[#allocation5 + $0x28] sm:$0xff]
    %v189 = vld [vmem:[#allocation5 + $0x30] sm:$0xff]
    %v190 = vld [vmem:[#allocation5 + $0x38] sm:$0xff]
    %v191 = vld [vmem:[#allocation5 + $0x40] sm:$0xff]
    %v192 = vld [vmem:[#allocation5 + $0x48] sm:$0xff]
    %v193 = vld [vmem:[#allocation5 + $0x50] sm:$0xff]
    %v194 = vld [vmem:[#allocation5 + $0x58] sm:$0xff]
    %v195 = vld [vmem:[%s2] sm:$0x3f]
    %v197 = vlaneseq
    %v198 = vshrl.u32 %v197, 7
    %v199 = vsub.s32 0, %v198
    %v200 = vrot.slane %v195, %v199
    %v201 = vlaneseq
    %v202 = vshrl.u32 %v201, 7
    %v203 = vsub.s32 1, %v202
    %v204 = vrot.slane %v195, %v203
    %v205 = vlaneseq
    %v206 = vshrl.u32 %v205, 7
    %v207 = vsub.s32 2, %v206
    %v208 = vrot.slane %v195, %v207
    %v209 = vlaneseq
    %v210 = vshrl.u32 %v209, 7
    %v211 = vsub.s32 3, %v210
    %v212 = vrot.slane %v195, %v211
    %v213 = vlaneseq
    %v214 = vshrl.u32 %v213, 7
    %v215 = vsub.s32 4, %v214
    %v216 = vrot.slane %v195, %v215
    %v217 = vlaneseq
    %v218 = vshrl.u32 %v217, 7
    %v219 = vsub.s32 5, %v218
    %v220 = vrot.slane %v195, %v219
    %v235 = vunpack.c.l.b16 %v175
    %v236 = vunpack.c.l.b16 %v176
    %v237 = vunpack.c.l.b16 %v177
    %v238 = vunpack.c.l.b16 %v178
    %v239 = vunpack.c.l.b16 %v179
    %v240 = vunpack.c.l.b16 %v180
    %v241 = vunpack.c.l.b16 %v181
    %v242 = vunpack.c.l.b16 %v182
    %vm243 = vcmask 1041409
    %v244 = vsel %vm243, %v236, %v235
    %vm245 = vcmask 1042434
    %v246 = vsel %vm245, %v237, %v244
    %vm247 = vcmask 1043459
    %v248 = vsel %vm247, %v238, %v246
    %vm249 = vcmask 1044484
    %v250 = vsel %vm249, %v239, %v248
    %vm251 = vcmask 1045509
    %v252 = vsel %vm251, %v240, %v250
    %vm253 = vcmask 1046534
    %v254 = vsel %vm253, %v241, %v252
    %vm255 = vcmask 1047559
    %v256 = vsel %vm255, %v242, %v254
    %v257 = vpack.c.b16 %v256, %v256
    %v270 = vunpack.c.l.b16 %v183
    %v271 = vunpack.c.h.b16 %v183
    %v272 = vunpack.c.l.b16 %v184
    %v273 = vunpack.c.h.b16 %v184
    %v274 = vunpack.c.l.b16 %v185
    %v275 = vunpack.c.h.b16 %v185
    %v276 = vunpack.c.l.b16 %v186
    %v277 = vunpack.c.h.b16 %v186
    %v278 = vunpack.c.l.b16 %v187
    %v279 = vunpack.c.h.b16 %v187
    %v280 = vunpack.c.l.b16 %v188
    %v281 = vunpack.c.h.b16 %v188
    %v282 = vunpack.c.l.b16 %v189
    %v283 = vunpack.c.h.b16 %v189
    %v284 = vunpack.c.l.b16 %v190
    %v285 = vunpack.c.h.b16 %v190
    %v286 = vunpack.c.l.b16 %v191
    %v287 = vunpack.c.h.b16 %v191
    %v288 = vunpack.c.l.b16 %v192
    %v289 = vunpack.c.h.b16 %v192
    %v290 = vunpack.c.l.b16 %v193
    %v291 = vunpack.c.h.b16 %v193
    %v292 = vunpack.c.l.b16 %v194
    %v293 = vunpack.c.h.b16 %v194
    %v294 = vpack.c.b16 %v276, %v270
    %v295 = vpack.c.b16 %v277, %v271
    %v296 = vpack.c.b16 %v278, %v272
    %v297 = vpack.c.b16 %v279, %v273
    %v298 = vpack.c.b16 %v280, %v274
    %v299 = vpack.c.b16 %v281, %v275
    %v300 = vpack.c.b16 %v288, %v282
    %v301 = vpack.c.b16 %v289, %v283
    %v302 = vpack.c.b16 %v290, %v284
    %v303 = vpack.c.b16 %v291, %v285
    %v304 = vpack.c.b16 %v292, %v286
    %v305 = vpack.c.b16 %v293, %v287
    %v319 = vsel %vm110, %v257, 0
    %321 = vmatprep.subr.bf16.mxu0 %v295
    %322 = vmatpush1.bf16.msra.mxu0 %v294
    %323 = vmatprep.subr.bf16.mxu0 %v301
    %324 = vmatpush1.bf16.msra.mxu0 %v300
    %325 = vmatprep.subr.bf16.mxu0 0
    %326 = vmatpush1.bf16.msra.mxu0 0
    %327 = vmatprep.subr.bf16.mxu0 0
    %328 = vmatpush1.bf16.msra.mxu0 0
    %329 = vmatprep.subr.bf16.mxu0 0
    %330 = vmatpush1.bf16.msra.mxu0 0
    %331 = vmatprep.subr.bf16.mxu0 0
    %332 = vmatpush1.bf16.msra.mxu0 0
    %333 = vmatprep.subr.bf16.mxu0 0
    %334 = vmatpush1.bf16.msra.mxu0 0
    %335 = vmatprep.subr.bf16.mxu0 0
    %336 = vmatpush1.bf16.msra.mxu0 0
    %337 = vmatprep.subr.bf16.mxu0 0
    %338 = vmatpush1.bf16.msra.mxu0 0
    %339 = vmatprep.subr.bf16.mxu0 0
    %340 = vmatpush1.bf16.msra.mxu0 0
    %341 = vmatprep.subr.bf16.mxu0 0
    %342 = vmatpush1.bf16.msra.mxu0 0
    %343 = vmatprep.subr.bf16.mxu0 0
    %344 = vmatpush1.bf16.msra.mxu0 0
    %345 = vmatprep.subr.bf16.mxu0 0
    %346 = vmatpush1.bf16.msra.mxu0 0
    %347 = vmatprep.subr.bf16.mxu0 0
    %348 = vmatpush1.bf16.msra.mxu0 0
    %349 = vmatprep.subr.bf16.mxu0 0
    %350 = vmatpush1.bf16.msra.mxu0 0
    %351 = vmatprep.subr.bf16.mxu0 0
    %352 = vmatpush1.bf16.msra.mxu0 0
    %353 = vmatprep.mubr.bf16.mxu0 0
    %354 = vmatmul.mubr.bf16.gmra.mrb[0].mxu0 %v319
    %v355 = vpop.f32.mrb[0].mxu0
    %v356 = vadd.f32 %v200, %v355
    %v357 = vpop.f32.mrb[0].mxu0
    %v358 = vadd.f32 %v204, %v357
    %v359 = vpop.f32.mrb[0].mxu0
    %v360 = vpop.f32.mrb[0].mxu0
    %361 = vdwg.mxu0
    %362 = vmatprep.subr.bf16.mxu0 %v297
    %363 = vmatpush1.bf16.msra.mxu0 %v296
    %364 = vmatprep.subr.bf16.mxu0 %v303
    %365 = vmatpush1.bf16.msra.mxu0 %v302
    %366 = vmatprep.subr.bf16.mxu0 0
    %367 = vmatpush1.bf16.msra.mxu0 0
    %368 = vmatprep.subr.bf16.mxu0 0
    %369 = vmatpush1.bf16.msra.mxu0 0
    %370 = vmatprep.subr.bf16.mxu0 0
    %371 = vmatpush1.bf16.msra.mxu0 0
    %372 = vmatprep.subr.bf16.mxu0 0
    %373 = vmatpush1.bf16.msra.mxu0 0
    %374 = vmatprep.subr.bf16.mxu0 0
    %375 = vmatpush1.bf16.msra.mxu0 0
    %376 = vmatprep.subr.bf16.mxu0 0
    %377 = vmatpush1.bf16.msra.mxu0 0
    %378 = vmatprep.subr.bf16.mxu0 0
    %379 = vmatpush1.bf16.msra.mxu0 0
    %380 = vmatprep.subr.bf16.mxu0 0
    %381 = vmatpush1.bf16.msra.mxu0 0
    %382 = vmatprep.subr.bf16.mxu0 0
    %383 = vmatpush1.bf16.msra.mxu0 0
    %384 = vmatprep.subr.bf16.mxu0 0
    %385 = vmatpush1.bf16.msra.mxu0 0
    %386 = vmatprep.subr.bf16.mxu0 0
    %387 = vmatpush1.bf16.msra.mxu0 0
    %388 = vmatprep.subr.bf16.mxu0 0
    %389 = vmatpush1.bf16.msra.mxu0 0
    %390 = vmatprep.subr.bf16.mxu0 0
    %391 = vmatpush1.bf16.msra.mxu0 0
    %392 = vmatprep.subr.bf16.mxu0 0
    %393 = vmatpush1.bf16.msra.mxu0 0
    %394 = vmatprep.mubr.bf16.mxu0 0
    %395 = vmatmul.mubr.bf16.gmra.mrb[0].mxu0 %v319
    %v396 = vpop.f32.mrb[0].mxu0
    %v397 = vadd.f32 %v208, %v396
    %v398 = vpop.f32.mrb[0].mxu0
    %v399 = vadd.f32 %v212, %v398
    %v400 = vpop.f32.mrb[0].mxu0
    %v401 = vpop.f32.mrb[0].mxu0
    %402 = vdwg.mxu0
    %403 = vmatprep.subr.bf16.mxu0 %v299
    %404 = vmatpush1.bf16.msra.mxu0 %v298
    %405 = vmatprep.subr.bf16.mxu0 %v305
    %406 = vmatpush1.bf16.msra.mxu0 %v304
    %407 = vmatprep.subr.bf16.mxu0 0
    %408 = vmatpush1.bf16.msra.mxu0 0
    %409 = vmatprep.subr.bf16.mxu0 0
    %410 = vmatpush1.bf16.msra.mxu0 0
    %411 = vmatprep.subr.bf16.mxu0 0
    %412 = vmatpush1.bf16.msra.mxu0 0
    %413 = vmatprep.subr.bf16.mxu0 0
    %414 = vmatpush1.bf16.msra.mxu0 0
    %415 = vmatprep.subr.bf16.mxu0 0
    %416 = vmatpush1.bf16.msra.mxu0 0
    %417 = vmatprep.subr.bf16.mxu0 0
    %418 = vmatpush1.bf16.msra.mxu0 0
    %419 = vmatprep.subr.bf16.mxu0 0
    %420 = vmatpush1.bf16.msra.mxu0 0
    %421 = vmatprep.subr.bf16.mxu0 0
    %422 = vmatpush1.bf16.msra.mxu0 0
    %423 = vmatprep.subr.bf16.mxu0 0
    %424 = vmatpush1.bf16.msra.mxu0 0
    %425 = vmatprep.subr.bf16.mxu0 0
    %426 = vmatpush1.bf16.msra.mxu0 0
    %427 = vmatprep.subr.bf16.mxu0 0
    %428 = vmatpush1.bf16.msra.mxu0 0
    %429 = vmatprep.subr.bf16.mxu0 0
    %430 = vmatpush1.bf16.msra.mxu0 0
    %431 = vmatprep.subr.bf16.mxu0 0
    %432 = vmatpush1.bf16.msra.mxu0 0
    %433 = vmatprep.subr.bf16.mxu0 0
    %434 = vmatpush1.bf16.msra.mxu0 0
    %435 = vmatprep.mubr.bf16.mxu0 0
    %436 = vmatmul.mubr.bf16.gmra.mrb[0].mxu0 %v319
    %v437 = vpop.f32.mrb[0].mxu0
    %v438 = vadd.f32 %v216, %v437
    %v439 = vpop.f32.mrb[0].mxu0
    %v440 = vadd.f32 %v220, %v439
    %v441 = vpop.f32.mrb[0].mxu0
    %v442 = vpop.f32.mrb[0].mxu0
    %443 = vdwg.mxu0
    %v444 = vmax.f32 %v356, 0.0
    %v445 = vmax.f32 %v358, 0.0
    %v446 = vmax.f32 %v397, 0.0
    %v447 = vmax.f32 %v399, 0.0
    %v448 = vmax.f32 %v438, 0.0
    %v449 = vmax.f32 %v440, 0.0
    %v450 = vpack.c.bf16 %v444, %v444
    %v451 = vpack.c.bf16 %v445, %v445
    %v452 = vpack.c.bf16 %v446, %v446
    %v453 = vpack.c.bf16 %v447, %v447
    %v454 = vpack.c.bf16 %v448, %v448
    %v455 = vpack.c.bf16 %v449, %v449
    %v456 = vld [vmem:[#allocation7] sm:$0xff]
    %v457 = vld [vmem:[#allocation7 + $0x8] sm:$0xff]
    %v458 = vld [vmem:[#allocation7 + $0x10] sm:$0xff]
    %v459 = vld [vmem:[#allocation7 + $0x18] sm:$0xff]
    %v460 = vld [vmem:[#allocation7 + $0x20] sm:$0xff]
    %v461 = vld [vmem:[#allocation7 + $0x28] sm:$0xff]
    %v462 = vld [vmem:[#allocation7 + $0x30] sm:$0xff]
    %v463 = vld [vmem:[#allocation7 + $0x38] sm:$0xff]
    %v464 = vld [vmem:[#allocation7 + $0x40] sm:$0xff]
    %v465 = vld [vmem:[#allocation7 + $0x48] sm:$0xff]
    %v466 = vld [vmem:[#allocation7 + $0x50] sm:$0xff]
    %v467 = vld [vmem:[#allocation7 + $0x58] sm:$0xff]
    %v468 = vld [vmem:[#allocation7 + $0x60] sm:$0xff]
    %v469 = vld [vmem:[#allocation7 + $0x68] sm:$0xff]
    %v470 = vld [vmem:[#allocation7 + $0x70] sm:$0xff]
    %v471 = vld [vmem:[#allocation7 + $0x78] sm:$0xff]
    %v472 = vld [vmem:[#allocation7 + $0x80] sm:$0xff]
    %v473 = vld [vmem:[#allocation7 + $0x88] sm:$0xff]
    %v474 = vld [vmem:[#allocation7 + $0x90] sm:$0xff]
    %v475 = vld [vmem:[#allocation7 + $0x98] sm:$0xff]
    %v476 = vld [vmem:[#allocation7 + $0xa0] sm:$0xff]
    %v477 = vld [vmem:[#allocation7 + $0xa8] sm:$0xff]
    %v478 = vld [vmem:[#allocation7 + $0xb0] sm:$0xff]
    %v479 = vld [vmem:[#allocation7 + $0xb8] sm:$0xff]
    %v480 = vld [vmem:[#allocation7 + $0xc0] sm:$0xff]
    %v481 = vld [vmem:[#allocation7 + $0xc8] sm:$0xff]
    %v482 = vld [vmem:[#allocation7 + $0xd0] sm:$0xff]
    %v483 = vld [vmem:[#allocation7 + $0xd8] sm:$0xff]
    %v484 = vld [vmem:[#allocation7 + $0xe0] sm:$0xff]
    %v485 = vld [vmem:[#allocation7 + $0xe8] sm:$0xff]
    %v486 = vld [vmem:[#allocation7 + $0xf0] sm:$0xff]
    %v487 = vld [vmem:[#allocation7 + $0xf8] sm:$0xff]
    %v488 = vld [vmem:[#allocation7 + $0x100] sm:$0xff]
    %v489 = vld [vmem:[#allocation7 + $0x108] sm:$0xff]
    %v490 = vld [vmem:[#allocation7 + $0x110] sm:$0xff]
    %v491 = vld [vmem:[#allocation7 + $0x118] sm:$0xff]
    %v492 = vld [vmem:[#allocation7 + $0x120] sm:$0xff]
    %v493 = vld [vmem:[#allocation7 + $0x128] sm:$0xff]
    %v494 = vld [vmem:[#allocation7 + $0x130] sm:$0xff]
    %v495 = vld [vmem:[#allocation7 + $0x138] sm:$0xff]
    %v496 = vld [vmem:[#allocation7 + $0x140] sm:$0xff]
    %v497 = vld [vmem:[#allocation7 + $0x148] sm:$0xff]
    %v498 = vld [vmem:[#allocation7 + $0x150] sm:$0xff]
    %v499 = vld [vmem:[#allocation7 + $0x158] sm:$0xff]
    %v500 = vld [vmem:[#allocation7 + $0x160] sm:$0xff]
    %v501 = vld [vmem:[#allocation7 + $0x168] sm:$0xff]
    %v502 = vld [vmem:[#allocation7 + $0x170] sm:$0xff]
    %v503 = vld [vmem:[#allocation7 + $0x178] sm:$0xff]
    %v504 = vld [vmem:[#allocation7 + $0x180] sm:$0xff]
    %v505 = vld [vmem:[#allocation7 + $0x188] sm:$0xff]
    %v506 = vld [vmem:[#allocation7 + $0x190] sm:$0xff]
    %v507 = vld [vmem:[#allocation7 + $0x198] sm:$0xff]
    %v508 = vld [vmem:[#allocation7 + $0x1a0] sm:$0xff]
    %v509 = vld [vmem:[#allocation7 + $0x1a8] sm:$0xff]
    %v510 = vld [vmem:[#allocation7 + $0x1b0] sm:$0xff]
    %v511 = vld [vmem:[#allocation7 + $0x1b8] sm:$0xff]
    %v512 = vld [vmem:[#allocation7 + $0x1c0] sm:$0xff]
    %v513 = vld [vmem:[#allocation7 + $0x1c8] sm:$0xff]
    %v514 = vld [vmem:[#allocation7 + $0x1d0] sm:$0xff]
    %v515 = vld [vmem:[#allocation7 + $0x1d8] sm:$0xff]
    %v516 = vld [vmem:[#allocation7 + $0x1e0] sm:$0xff]
    %v517 = vld [vmem:[#allocation7 + $0x1e8] sm:$0xff]
    %v518 = vld [vmem:[#allocation7 + $0x1f0] sm:$0xff]
    %v519 = vld [vmem:[#allocation7 + $0x1f8] sm:$0xff]
    %v520 = vld [vmem:[#allocation7 + $0x200] sm:$0xff]
    %v521 = vld [vmem:[#allocation7 + $0x208] sm:$0xff]
    %v522 = vld [vmem:[#allocation7 + $0x210] sm:$0xff]
    %v523 = vld [vmem:[#allocation7 + $0x218] sm:$0xff]
    %v524 = vld [vmem:[#allocation7 + $0x220] sm:$0xff]
    %v525 = vld [vmem:[#allocation7 + $0x228] sm:$0xff]
    %v526 = vld [vmem:[#allocation7 + $0x230] sm:$0xff]
    %v527 = vld [vmem:[#allocation7 + $0x238] sm:$0xff]
    %v528 = vld [vmem:[#allocation7 + $0x240] sm:$0xff]
    %v529 = vld [vmem:[#allocation7 + $0x248] sm:$0xff]
    %v530 = vld [vmem:[#allocation7 + $0x250] sm:$0xff]
    %v531 = vld [vmem:[#allocation7 + $0x258] sm:$0xff]
    %v532 = vld [vmem:[#allocation7 + $0x260] sm:$0xff]
    %v533 = vld [vmem:[#allocation7 + $0x268] sm:$0xff]
    %v534 = vld [vmem:[#allocation7 + $0x270] sm:$0xff]
    %v535 = vld [vmem:[#allocation7 + $0x278] sm:$0xff]
    %v536 = vld [vmem:[#allocation7 + $0x280] sm:$0xff]
    %v537 = vld [vmem:[#allocation7 + $0x288] sm:$0xff]
    %v538 = vld [vmem:[#allocation7 + $0x290] sm:$0xff]
    %v539 = vld [vmem:[#allocation7 + $0x298] sm:$0xff]
    %v540 = vld [vmem:[#allocation7 + $0x2a0] sm:$0xff]
    %v541 = vld [vmem:[#allocation7 + $0x2a8] sm:$0xff]
    %v542 = vld [vmem:[#allocation7 + $0x2b0] sm:$0xff]
    %v543 = vld [vmem:[#allocation7 + $0x2b8] sm:$0xff]
    %v544 = vld [vmem:[#allocation7 + $0x2c0] sm:$0xff]
    %v545 = vld [vmem:[#allocation7 + $0x2c8] sm:$0xff]
    %v546 = vld [vmem:[#allocation7 + $0x2d0] sm:$0xff]
    %v547 = vld [vmem:[#allocation7 + $0x2d8] sm:$0xff]
    %v548 = vld [vmem:[#allocation7 + $0x2e0] sm:$0xff]
    %v549 = vld [vmem:[#allocation7 + $0x2e8] sm:$0xff]
    %v550 = vld [vmem:[#allocation7 + $0x2f0] sm:$0xff]
    %v551 = vld [vmem:[#allocation7 + $0x2f8] sm:$0xff]
    %v552 = vld [vmem:[#allocation7 + $0x300] sm:$0xff]
    %v553 = vld [vmem:[#allocation7 + $0x308] sm:$0xff]
    %v554 = vld [vmem:[#allocation7 + $0x310] sm:$0xff]
    %v555 = vld [vmem:[#allocation7 + $0x318] sm:$0xff]
    %v556 = vld [vmem:[#allocation7 + $0x320] sm:$0xff]
    %v557 = vld [vmem:[#allocation7 + $0x328] sm:$0xff]
    %v558 = vld [vmem:[#allocation7 + $0x330] sm:$0xff]
    %v559 = vld [vmem:[#allocation7 + $0x338] sm:$0xff]
    %v560 = vld [vmem:[#allocation7 + $0x340] sm:$0xff]
    %v561 = vld [vmem:[#allocation7 + $0x348] sm:$0xff]
    %v562 = vld [vmem:[#allocation7 + $0x350] sm:$0xff]
    %v563 = vld [vmem:[#allocation7 + $0x358] sm:$0xff]
    %v564 = vld [vmem:[#allocation7 + $0x360] sm:$0xff]
    %v565 = vld [vmem:[#allocation7 + $0x368] sm:$0xff]
    %v566 = vld [vmem:[#allocation7 + $0x370] sm:$0xff]
    %v567 = vld [vmem:[#allocation7 + $0x378] sm:$0xff]
    %v568 = vld [vmem:[#allocation7 + $0x380] sm:$0xff]
    %v569 = vld [vmem:[#allocation7 + $0x388] sm:$0xff]
    %v570 = vld [vmem:[#allocation7 + $0x390] sm:$0xff]
    %v571 = vld [vmem:[#allocation7 + $0x398] sm:$0xff]
    %v572 = vld [vmem:[#allocation7 + $0x3a0] sm:$0xff]
    %v573 = vld [vmem:[#allocation7 + $0x3a8] sm:$0xff]
    %v574 = vld [vmem:[#allocation7 + $0x3b0] sm:$0xff]
    %v575 = vld [vmem:[#allocation7 + $0x3b8] sm:$0xff]
    %v576 = vld [vmem:[#allocation7 + $0x3c0] sm:$0xff]
    %v577 = vld [vmem:[#allocation7 + $0x3c8] sm:$0xff]
    %v578 = vld [vmem:[#allocation7 + $0x3d0] sm:$0xff]
    %v579 = vld [vmem:[#allocation7 + $0x3d8] sm:$0xff]
    %v580 = vld [vmem:[#allocation7 + $0x3e0] sm:$0xff]
    %v581 = vld [vmem:[#allocation7 + $0x3e8] sm:$0xff]
    %v582 = vld [vmem:[#allocation7 + $0x3f0] sm:$0xff]
    %v583 = vld [vmem:[#allocation7 + $0x3f8] sm:$0xff]
    %v584 = vld [vmem:[#allocation7 + $0x400] sm:$0xff]
    %v585 = vld [vmem:[#allocation7 + $0x408] sm:$0xff]
    %v586 = vld [vmem:[#allocation7 + $0x410] sm:$0xff]
    %v587 = vld [vmem:[#allocation7 + $0x418] sm:$0xff]
    %v588 = vld [vmem:[#allocation7 + $0x420] sm:$0xff]
    %v589 = vld [vmem:[#allocation7 + $0x428] sm:$0xff]
    %v590 = vld [vmem:[#allocation7 + $0x430] sm:$0xff]
    %v591 = vld [vmem:[#allocation7 + $0x438] sm:$0xff]
    %v592 = vld [vmem:[#allocation7 + $0x440] sm:$0xff]
    %v593 = vld [vmem:[#allocation7 + $0x448] sm:$0xff]
    %v594 = vld [vmem:[#allocation7 + $0x450] sm:$0xff]
    %v595 = vld [vmem:[#allocation7 + $0x458] sm:$0xff]
    %v596 = vld [vmem:[#allocation7 + $0x460] sm:$0xff]
    %v597 = vld [vmem:[#allocation7 + $0x468] sm:$0xff]
    %v598 = vld [vmem:[#allocation7 + $0x470] sm:$0xff]
    %v599 = vld [vmem:[#allocation7 + $0x478] sm:$0xff]
    %v600 = vld [vmem:[#allocation7 + $0x480] sm:$0xff]
    %v601 = vld [vmem:[#allocation7 + $0x488] sm:$0xff]
    %v602 = vld [vmem:[#allocation7 + $0x490] sm:$0xff]
    %v603 = vld [vmem:[#allocation7 + $0x498] sm:$0xff]
    %v604 = vld [vmem:[#allocation7 + $0x4a0] sm:$0xff]
    %v605 = vld [vmem:[#allocation7 + $0x4a8] sm:$0xff]
    %v606 = vld [vmem:[#allocation7 + $0x4b0] sm:$0xff]
    %v607 = vld [vmem:[#allocation7 + $0x4b8] sm:$0xff]
    %v608 = vld [vmem:[#allocation7 + $0x4c0] sm:$0xff]
    %v609 = vld [vmem:[#allocation7 + $0x4c8] sm:$0xff]
    %v610 = vld [vmem:[#allocation7 + $0x4d0] sm:$0xff]
    %v611 = vld [vmem:[#allocation7 + $0x4d8] sm:$0xff]
    %v612 = vld [vmem:[#allocation7 + $0x4e0] sm:$0xff]
    %v613 = vld [vmem:[#allocation7 + $0x4e8] sm:$0xff]
    %v614 = vld [vmem:[#allocation7 + $0x4f0] sm:$0xff]
    %v615 = vld [vmem:[#allocation7 + $0x4f8] sm:$0xff]
    %v616 = vld [vmem:[#allocation7 + $0x500] sm:$0xff]
    %v617 = vld [vmem:[#allocation7 + $0x508] sm:$0xff]
    %v618 = vld [vmem:[#allocation7 + $0x510] sm:$0xff]
    %v619 = vld [vmem:[#allocation7 + $0x518] sm:$0xff]
    %v620 = vld [vmem:[#allocation7 + $0x520] sm:$0xff]
    %v621 = vld [vmem:[#allocation7 + $0x528] sm:$0xff]
    %v622 = vld [vmem:[#allocation7 + $0x530] sm:$0xff]
    %v623 = vld [vmem:[#allocation7 + $0x538] sm:$0xff]
    %v624 = vld [vmem:[#allocation7 + $0x540] sm:$0xff]
    %v625 = vld [vmem:[#allocation7 + $0x548] sm:$0xff]
    %v626 = vld [vmem:[#allocation7 + $0x550] sm:$0xff]
    %v627 = vld [vmem:[#allocation7 + $0x558] sm:$0xff]
    %v628 = vld [vmem:[#allocation7 + $0x560] sm:$0xff]
    %v629 = vld [vmem:[#allocation7 + $0x568] sm:$0xff]
    %v630 = vld [vmem:[#allocation7 + $0x570] sm:$0xff]
    %v631 = vld [vmem:[#allocation7 + $0x578] sm:$0xff]
    %v632 = vld [vmem:[#allocation7 + $0x580] sm:$0xff]
    %v633 = vld [vmem:[#allocation7 + $0x588] sm:$0xff]
    %v634 = vld [vmem:[#allocation7 + $0x590] sm:$0xff]
    %v635 = vld [vmem:[#allocation7 + $0x598] sm:$0xff]
    %v636 = vld [vmem:[#allocation7 + $0x5a0] sm:$0xff]
    %v637 = vld [vmem:[#allocation7 + $0x5a8] sm:$0xff]
    %v638 = vld [vmem:[#allocation7 + $0x5b0] sm:$0xff]
    %v639 = vld [vmem:[#allocation7 + $0x5b8] sm:$0xff]
    %v640 = vld [vmem:[#allocation7 + $0x5c0] sm:$0xff]
    %v641 = vld [vmem:[#allocation7 + $0x5c8] sm:$0xff]
    %v642 = vld [vmem:[#allocation7 + $0x5d0] sm:$0xff]
    %v643 = vld [vmem:[#allocation7 + $0x5d8] sm:$0xff]
    %v644 = vld [vmem:[#allocation7 + $0x5e0] sm:$0xff]
    %v645 = vld [vmem:[#allocation7 + $0x5e8] sm:$0xff]
    %v646 = vld [vmem:[#allocation7 + $0x5f0] sm:$0xff]
    %v647 = vld [vmem:[#allocation7 + $0x5f8] sm:$0xff]
    %v648 = vld [vmem:[%s4] sm:$0xf]
    %v650 = vlaneseq
    %v651 = vshrl.u32 %v650, 7
    %v652 = vsub.s32 0, %v651
    %v653 = vrot.slane %v648, %v652
    %v654 = vlaneseq
    %v655 = vshrl.u32 %v654, 7
    %v656 = vsub.s32 1, %v655
    %v657 = vrot.slane %v648, %v656
    %v658 = vlaneseq
    %v659 = vshrl.u32 %v658, 7
    %v660 = vsub.s32 2, %v659
    %v661 = vrot.slane %v648, %v660
    %v662 = vlaneseq
    %v663 = vshrl.u32 %v662, 7
    %v664 = vsub.s32 3, %v663
    %v665 = vrot.slane %v648, %v664
    %v862 = vunpack.c.l.b16 %v456
    %v863 = vunpack.c.h.b16 %v456
    %v864 = vunpack.c.l.b16 %v457
    %v865 = vunpack.c.h.b16 %v457
    %v866 = vunpack.c.l.b16 %v458
    %v867 = vunpack.c.h.b16 %v458
    %v868 = vunpack.c.l.b16 %v459
    %v869 = vunpack.c.h.b16 %v459
    %v870 = vunpack.c.l.b16 %v460
    %v871 = vunpack.c.h.b16 %v460
    %v872 = vunpack.c.l.b16 %v461
    %v873 = vunpack.c.h.b16 %v461
    %v874 = vunpack.c.l.b16 %v462
    %v875 = vunpack.c.h.b16 %v462
    %v876 = vunpack.c.l.b16 %v463
    %v877 = vunpack.c.h.b16 %v463
    %v878 = vunpack.c.l.b16 %v464
    %v879 = vunpack.c.h.b16 %v464
    %v880 = vunpack.c.l.b16 %v465
    %v881 = vunpack.c.h.b16 %v465
    %v882 = vunpack.c.l.b16 %v466
    %v883 = vunpack.c.h.b16 %v466
    %v884 = vunpack.c.l.b16 %v467
    %v885 = vunpack.c.h.b16 %v467
    %v886 = vunpack.c.l.b16 %v468
    %v887 = vunpack.c.h.b16 %v468
    %v888 = vunpack.c.l.b16 %v469
    %v889 = vunpack.c.h.b16 %v469
    %v890 = vunpack.c.l.b16 %v470
    %v891 = vunpack.c.h.b16 %v470
    %v892 = vunpack.c.l.b16 %v471
    %v893 = vunpack.c.h.b16 %v471
    %v894 = vunpack.c.l.b16 %v472
    %v895 = vunpack.c.h.b16 %v472
    %v896 = vunpack.c.l.b16 %v473
    %v897 = vunpack.c.h.b16 %v473
    %v898 = vunpack.c.l.b16 %v474
    %v899 = vunpack.c.h.b16 %v474
    %v900 = vunpack.c.l.b16 %v475
    %v901 = vunpack.c.h.b16 %v475
    %v902 = vunpack.c.l.b16 %v476
    %v903 = vunpack.c.h.b16 %v476
    %v904 = vunpack.c.l.b16 %v477
    %v905 = vunpack.c.h.b16 %v477
    %v906 = vunpack.c.l.b16 %v478
    %v907 = vunpack.c.h.b16 %v478
    %v908 = vunpack.c.l.b16 %v479
    %v909 = vunpack.c.h.b16 %v479
    %v910 = vunpack.c.l.b16 %v480
    %v911 = vunpack.c.h.b16 %v480
    %v912 = vunpack.c.l.b16 %v481
    %v913 = vunpack.c.h.b16 %v481
    %v914 = vunpack.c.l.b16 %v482
    %v915 = vunpack.c.h.b16 %v482
    %v916 = vunpack.c.l.b16 %v483
    %v917 = vunpack.c.h.b16 %v483
    %v918 = vunpack.c.l.b16 %v484
    %v919 = vunpack.c.h.b16 %v484
    %v920 = vunpack.c.l.b16 %v485
    %v921 = vunpack.c.h.b16 %v485
    %v922 = vunpack.c.l.b16 %v486
    %v923 = vunpack.c.h.b16 %v486
    %v924 = vunpack.c.l.b16 %v487
    %v925 = vunpack.c.h.b16 %v487
    %v926 = vunpack.c.l.b16 %v488
    %v927 = vunpack.c.h.b16 %v488
    %v928 = vunpack.c.l.b16 %v489
    %v929 = vunpack.c.h.b16 %v489
    %v930 = vunpack.c.l.b16 %v490
    %v931 = vunpack.c.h.b16 %v490
    %v932 = vunpack.c.l.b16 %v491
    %v933 = vunpack.c.h.b16 %v491
    %v934 = vunpack.c.l.b16 %v492
    %v935 = vunpack.c.h.b16 %v492
    %v936 = vunpack.c.l.b16 %v493
    %v937 = vunpack.c.h.b16 %v493
    %v938 = vunpack.c.l.b16 %v494
    %v939 = vunpack.c.h.b16 %v494
    %v940 = vunpack.c.l.b16 %v495
    %v941 = vunpack.c.h.b16 %v495
    %v942 = vunpack.c.l.b16 %v496
    %v943 = vunpack.c.h.b16 %v496
    %v944 = vunpack.c.l.b16 %v497
    %v945 = vunpack.c.h.b16 %v497
    %v946 = vunpack.c.l.b16 %v498
    %v947 = vunpack.c.h.b16 %v498
    %v948 = vunpack.c.l.b16 %v499
    %v949 = vunpack.c.h.b16 %v499
    %v950 = vunpack.c.l.b16 %v500
    %v951 = vunpack.c.h.b16 %v500
    %v952 = vunpack.c.l.b16 %v501
    %v953 = vunpack.c.h.b16 %v501
    %v954 = vunpack.c.l.b16 %v502
    %v955 = vunpack.c.h.b16 %v502
    %v956 = vunpack.c.l.b16 %v503
    %v957 = vunpack.c.h.b16 %v503
    %v958 = vunpack.c.l.b16 %v504
    %v959 = vunpack.c.h.b16 %v504
    %v960 = vunpack.c.l.b16 %v505
    %v961 = vunpack.c.h.b16 %v505
    %v962 = vunpack.c.l.b16 %v506
    %v963 = vunpack.c.h.b16 %v506
    %v964 = vunpack.c.l.b16 %v507
    %v965 = vunpack.c.h.b16 %v507
    %v966 = vunpack.c.l.b16 %v508
    %v967 = vunpack.c.h.b16 %v508
    %v968 = vunpack.c.l.b16 %v509
    %v969 = vunpack.c.h.b16 %v509
    %v970 = vunpack.c.l.b16 %v510
    %v971 = vunpack.c.h.b16 %v510
    %v972 = vunpack.c.l.b16 %v511
    %v973 = vunpack.c.h.b16 %v511
    %v974 = vunpack.c.l.b16 %v512
    %v975 = vunpack.c.h.b16 %v512
    %v976 = vunpack.c.l.b16 %v513
    %v977 = vunpack.c.h.b16 %v513
    %v978 = vunpack.c.l.b16 %v514
    %v979 = vunpack.c.h.b16 %v514
    %v980 = vunpack.c.l.b16 %v515
    %v981 = vunpack.c.h.b16 %v515
    %v982 = vunpack.c.l.b16 %v516
    %v983 = vunpack.c.h.b16 %v516
    %v984 = vunpack.c.l.b16 %v517
    %v985 = vunpack.c.h.b16 %v517
    %v986 = vunpack.c.l.b16 %v518
    %v987 = vunpack.c.h.b16 %v518
    %v988 = vunpack.c.l.b16 %v519
    %v989 = vunpack.c.h.b16 %v519
    %v990 = vunpack.c.l.b16 %v520
    %v991 = vunpack.c.h.b16 %v520
    %v992 = vunpack.c.l.b16 %v521
    %v993 = vunpack.c.h.b16 %v521
    %v994 = vunpack.c.l.b16 %v522
    %v995 = vunpack.c.h.b16 %v522
    %v996 = vunpack.c.l.b16 %v523
    %v997 = vunpack.c.h.b16 %v523
    %v998 = vunpack.c.l.b16 %v524
    %v999 = vunpack.c.h.b16 %v524
    %v1000 = vunpack.c.l.b16 %v525
    %v1001 = vunpack.c.h.b16 %v525
    %v1002 = vunpack.c.l.b16 %v526
    %v1003 = vunpack.c.h.b16 %v526
    %v1004 = vunpack.c.l.b16 %v527
    %v1005 = vunpack.c.h.b16 %v527
    %v1006 = vunpack.c.l.b16 %v528
    %v1007 = vunpack.c.h.b16 %v528
    %v1008 = vunpack.c.l.b16 %v529
    %v1009 = vunpack.c.h.b16 %v529
    %v1010 = vunpack.c.l.b16 %v530
    %v1011 = vunpack.c.h.b16 %v530
    %v1012 = vunpack.c.l.b16 %v531
    %v1013 = vunpack.c.h.b16 %v531
    %v1014 = vunpack.c.l.b16 %v532
    %v1015 = vunpack.c.h.b16 %v532
    %v1016 = vunpack.c.l.b16 %v533
    %v1017 = vunpack.c.h.b16 %v533
    %v1018 = vunpack.c.l.b16 %v534
    %v1019 = vunpack.c.h.b16 %v534
    %v1020 = vunpack.c.l.b16 %v535
    %v1021 = vunpack.c.h.b16 %v535
    %v1022 = vunpack.c.l.b16 %v536
    %v1023 = vunpack.c.h.b16 %v536
    %v1024 = vunpack.c.l.b16 %v537
    %v1025 = vunpack.c.h.b16 %v537
    %v1026 = vunpack.c.l.b16 %v538
    %v1027 = vunpack.c.h.b16 %v538
    %v1028 = vunpack.c.l.b16 %v539
    %v1029 = vunpack.c.h.b16 %v539
    %v1030 = vunpack.c.l.b16 %v540
    %v1031 = vunpack.c.h.b16 %v540
    %v1032 = vunpack.c.l.b16 %v541
    %v1033 = vunpack.c.h.b16 %v541
    %v1034 = vunpack.c.l.b16 %v542
    %v1035 = vunpack.c.h.b16 %v542
    %v1036 = vunpack.c.l.b16 %v543
    %v1037 = vunpack.c.h.b16 %v543
    %v1038 = vunpack.c.l.b16 %v544
    %v1039 = vunpack.c.h.b16 %v544
    %v1040 = vunpack.c.l.b16 %v545
    %v1041 = vunpack.c.h.b16 %v545
    %v1042 = vunpack.c.l.b16 %v546
    %v1043 = vunpack.c.h.b16 %v546
    %v1044 = vunpack.c.l.b16 %v547
    %v1045 = vunpack.c.h.b16 %v547
    %v1046 = vunpack.c.l.b16 %v548
    %v1047 = vunpack.c.h.b16 %v548
    %v1048 = vunpack.c.l.b16 %v549
    %v1049 = vunpack.c.h.b16 %v549
    %v1050 = vunpack.c.l.b16 %v550
    %v1051 = vunpack.c.h.b16 %v550
    %v1052 = vunpack.c.l.b16 %v551
    %v1053 = vunpack.c.h.b16 %v551
    %v1054 = vunpack.c.l.b16 %v552
    %v1055 = vunpack.c.h.b16 %v552
    %v1056 = vunpack.c.l.b16 %v553
    %v1057 = vunpack.c.h.b16 %v553
    %v1058 = vunpack.c.l.b16 %v554
    %v1059 = vunpack.c.h.b16 %v554
    %v1060 = vunpack.c.l.b16 %v555
    %v1061 = vunpack.c.h.b16 %v555
    %v1062 = vunpack.c.l.b16 %v556
    %v1063 = vunpack.c.h.b16 %v556
    %v1064 = vunpack.c.l.b16 %v557
    %v1065 = vunpack.c.h.b16 %v557
    %v1066 = vunpack.c.l.b16 %v558
    %v1067 = vunpack.c.h.b16 %v558
    %v1068 = vunpack.c.l.b16 %v559
    %v1069 = vunpack.c.h.b16 %v559
    %v1070 = vunpack.c.l.b16 %v560
    %v1071 = vunpack.c.h.b16 %v560
    %v1072 = vunpack.c.l.b16 %v561
    %v1073 = vunpack.c.h.b16 %v561
    %v1074 = vunpack.c.l.b16 %v562
    %v1075 = vunpack.c.h.b16 %v562
    %v1076 = vunpack.c.l.b16 %v563
    %v1077 = vunpack.c.h.b16 %v563
    %v1078 = vunpack.c.l.b16 %v564
    %v1079 = vunpack.c.h.b16 %v564
    %v1080 = vunpack.c.l.b16 %v565
    %v1081 = vunpack.c.h.b16 %v565
    %v1082 = vunpack.c.l.b16 %v566
    %v1083 = vunpack.c.h.b16 %v566
    %v1084 = vunpack.c.l.b16 %v567
    %v1085 = vunpack.c.h.b16 %v567
    %v1086 = vunpack.c.l.b16 %v568
    %v1087 = vunpack.c.h.b16 %v568
    %v1088 = vunpack.c.l.b16 %v569
    %v1089 = vunpack.c.h.b16 %v569
    %v1090 = vunpack.c.l.b16 %v570
    %v1091 = vunpack.c.h.b16 %v570
    %v1092 = vunpack.c.l.b16 %v571
    %v1093 = vunpack.c.h.b16 %v571
    %v1094 = vunpack.c.l.b16 %v572
    %v1095 = vunpack.c.h.b16 %v572
    %v1096 = vunpack.c.l.b16 %v573
    %v1097 = vunpack.c.h.b16 %v573
    %v1098 = vunpack.c.l.b16 %v574
    %v1099 = vunpack.c.h.b16 %v574
    %v1100 = vunpack.c.l.b16 %v575
    %v1101 = vunpack.c.h.b16 %v575
    %v1102 = vunpack.c.l.b16 %v576
    %v1103 = vunpack.c.h.b16 %v576
    %v1104 = vunpack.c.l.b16 %v577
    %v1105 = vunpack.c.h.b16 %v577
    %v1106 = vunpack.c.l.b16 %v578
    %v1107 = vunpack.c.h.b16 %v578
    %v1108 = vunpack.c.l.b16 %v579
    %v1109 = vunpack.c.h.b16 %v579
    %v1110 = vunpack.c.l.b16 %v580
    %v1111 = vunpack.c.h.b16 %v580
    %v1112 = vunpack.c.l.b16 %v581
    %v1113 = vunpack.c.h.b16 %v581
    %v1114 = vunpack.c.l.b16 %v582
    %v1115 = vunpack.c.h.b16 %v582
    %v1116 = vunpack.c.l.b16 %v583
    %v1117 = vunpack.c.h.b16 %v583
    %v1118 = vunpack.c.l.b16 %v584
    %v1119 = vunpack.c.h.b16 %v584
    %v1120 = vunpack.c.l.b16 %v585
    %v1121 = vunpack.c.h.b16 %v585
    %v1122 = vunpack.c.l.b16 %v586
    %v1123 = vunpack.c.h.b16 %v586
    %v1124 = vunpack.c.l.b16 %v587
    %v1125 = vunpack.c.h.b16 %v587
    %v1126 = vunpack.c.l.b16 %v588
    %v1127 = vunpack.c.h.b16 %v588
    %v1128 = vunpack.c.l.b16 %v589
    %v1129 = vunpack.c.h.b16 %v589
    %v1130 = vunpack.c.l.b16 %v590
    %v1131 = vunpack.c.h.b16 %v590
    %v1132 = vunpack.c.l.b16 %v591
    %v1133 = vunpack.c.h.b16 %v591
    %v1134 = vunpack.c.l.b16 %v592
    %v1135 = vunpack.c.h.b16 %v592
    %v1136 = vunpack.c.l.b16 %v593
    %v1137 = vunpack.c.h.b16 %v593
    %v1138 = vunpack.c.l.b16 %v594
    %v1139 = vunpack.c.h.b16 %v594
    %v1140 = vunpack.c.l.b16 %v595
    %v1141 = vunpack.c.h.b16 %v595
    %v1142 = vunpack.c.l.b16 %v596
    %v1143 = vunpack.c.h.b16 %v596
    %v1144 = vunpack.c.l.b16 %v597
    %v1145 = vunpack.c.h.b16 %v597
    %v1146 = vunpack.c.l.b16 %v598
    %v1147 = vunpack.c.h.b16 %v598
    %v1148 = vunpack.c.l.b16 %v599
    %v1149 = vunpack.c.h.b16 %v599
    %v1150 = vunpack.c.l.b16 %v600
    %v1151 = vunpack.c.h.b16 %v600
    %v1152 = vunpack.c.l.b16 %v601
    %v1153 = vunpack.c.h.b16 %v601
    %v1154 = vunpack.c.l.b16 %v602
    %v1155 = vunpack.c.h.b16 %v602
    %v1156 = vunpack.c.l.b16 %v603
    %v1157 = vunpack.c.h.b16 %v603
    %v1158 = vunpack.c.l.b16 %v604
    %v1159 = vunpack.c.h.b16 %v604
    %v1160 = vunpack.c.l.b16 %v605
    %v1161 = vunpack.c.h.b16 %v605
    %v1162 = vunpack.c.l.b16 %v606
    %v1163 = vunpack.c.h.b16 %v606
    %v1164 = vunpack.c.l.b16 %v607
    %v1165 = vunpack.c.h.b16 %v607
    %v1166 = vunpack.c.l.b16 %v608
    %v1167 = vunpack.c.h.b16 %v608
    %v1168 = vunpack.c.l.b16 %v609
    %v1169 = vunpack.c.h.b16 %v609
    %v1170 = vunpack.c.l.b16 %v610
    %v1171 = vunpack.c.h.b16 %v610
    %v1172 = vunpack.c.l.b16 %v611
    %v1173 = vunpack.c.h.b16 %v611
    %v1174 = vunpack.c.l.b16 %v612
    %v1175 = vunpack.c.h.b16 %v612
    %v1176 = vunpack.c.l.b16 %v613
    %v1177 = vunpack.c.h.b16 %v613
    %v1178 = vunpack.c.l.b16 %v614
    %v1179 = vunpack.c.h.b16 %v614
    %v1180 = vunpack.c.l.b16 %v615
    %v1181 = vunpack.c.h.b16 %v615
    %v1182 = vunpack.c.l.b16 %v616
    %v1183 = vunpack.c.h.b16 %v616
    %v1184 = vunpack.c.l.b16 %v617
    %v1185 = vunpack.c.h.b16 %v617
    %v1186 = vunpack.c.l.b16 %v618
    %v1187 = vunpack.c.h.b16 %v618
    %v1188 = vunpack.c.l.b16 %v619
    %v1189 = vunpack.c.h.b16 %v619
    %v1190 = vunpack.c.l.b16 %v620
    %v1191 = vunpack.c.h.b16 %v620
    %v1192 = vunpack.c.l.b16 %v621
    %v1193 = vunpack.c.h.b16 %v621
    %v1194 = vunpack.c.l.b16 %v622
    %v1195 = vunpack.c.h.b16 %v622
    %v1196 = vunpack.c.l.b16 %v623
    %v1197 = vunpack.c.h.b16 %v623
    %v1198 = vunpack.c.l.b16 %v624
    %v1199 = vunpack.c.h.b16 %v624
    %v1200 = vunpack.c.l.b16 %v625
    %v1201 = vunpack.c.h.b16 %v625
    %v1202 = vunpack.c.l.b16 %v626
    %v1203 = vunpack.c.h.b16 %v626
    %v1204 = vunpack.c.l.b16 %v627
    %v1205 = vunpack.c.h.b16 %v627
    %v1206 = vunpack.c.l.b16 %v628
    %v1207 = vunpack.c.h.b16 %v628
    %v1208 = vunpack.c.l.b16 %v629
    %v1209 = vunpack.c.h.b16 %v629
    %v1210 = vunpack.c.l.b16 %v630
    %v1211 = vunpack.c.h.b16 %v630
    %v1212 = vunpack.c.l.b16 %v631
    %v1213 = vunpack.c.h.b16 %v631
    %v1214 = vunpack.c.l.b16 %v632
    %v1215 = vunpack.c.h.b16 %v632
    %v1216 = vunpack.c.l.b16 %v633
    %v1217 = vunpack.c.h.b16 %v633
    %v1218 = vunpack.c.l.b16 %v634
    %v1219 = vunpack.c.h.b16 %v634
    %v1220 = vunpack.c.l.b16 %v635
    %v1221 = vunpack.c.h.b16 %v635
    %v1222 = vunpack.c.l.b16 %v636
    %v1223 = vunpack.c.h.b16 %v636
    %v1224 = vunpack.c.l.b16 %v637
    %v1225 = vunpack.c.h.b16 %v637
    %v1226 = vunpack.c.l.b16 %v638
    %v1227 = vunpack.c.h.b16 %v638
    %v1228 = vunpack.c.l.b16 %v639
    %v1229 = vunpack.c.h.b16 %v639
    %v1230 = vunpack.c.l.b16 %v640
    %v1231 = vunpack.c.h.b16 %v640
    %v1232 = vunpack.c.l.b16 %v641
    %v1233 = vunpack.c.h.b16 %v641
    %v1234 = vunpack.c.l.b16 %v642
    %v1235 = vunpack.c.h.b16 %v642
    %v1236 = vunpack.c.l.b16 %v643
    %v1237 = vunpack.c.h.b16 %v643
    %v1238 = vunpack.c.l.b16 %v644
    %v1239 = vunpack.c.h.b16 %v644
    %v1240 = vunpack.c.l.b16 %v645
    %v1241 = vunpack.c.h.b16 %v645
    %v1242 = vunpack.c.l.b16 %v646
    %v1243 = vunpack.c.h.b16 %v646
    %v1244 = vunpack.c.l.b16 %v647
    %v1245 = vunpack.c.h.b16 %v647
    %v1246 = vpack.c.b16 %v866, %v862
    %v1247 = vpack.c.b16 %v867, %v863
    %v1248 = vpack.c.b16 %v868, %v864
    %v1249 = vpack.c.b16 %v869, %v865
    %v1250 = vpack.c.b16 %v874, %v870
    %v1251 = vpack.c.b16 %v875, %v871
    %v1252 = vpack.c.b16 %v876, %v872
    %v1253 = vpack.c.b16 %v877, %v873
    %v1254 = vpack.c.b16 %v882, %v878
    %v1255 = vpack.c.b16 %v883, %v879
    %v1256 = vpack.c.b16 %v884, %v880
    %v1257 = vpack.c.b16 %v885, %v881
    %v1258 = vpack.c.b16 %v890, %v886
    %v1259 = vpack.c.b16 %v891, %v887
    %v1260 = vpack.c.b16 %v892, %v888
    %v1261 = vpack.c.b16 %v893, %v889
    %v1262 = vpack.c.b16 %v898, %v894
    %v1263 = vpack.c.b16 %v899, %v895
    %v1264 = vpack.c.b16 %v900, %v896
    %v1265 = vpack.c.b16 %v901, %v897
    %v1266 = vpack.c.b16 %v906, %v902
    %v1267 = vpack.c.b16 %v907, %v903
    %v1268 = vpack.c.b16 %v908, %v904
    %v1269 = vpack.c.b16 %v909, %v905
    %v1270 = vpack.c.b16 %v914, %v910
    %v1271 = vpack.c.b16 %v915, %v911
    %v1272 = vpack.c.b16 %v916, %v912
    %v1273 = vpack.c.b16 %v917, %v913
    %v1274 = vpack.c.b16 %v922, %v918
    %v1275 = vpack.c.b16 %v923, %v919
    %v1276 = vpack.c.b16 %v924, %v920
    %v1277 = vpack.c.b16 %v925, %v921
    %v1278 = vpack.c.b16 %v930, %v926
    %v1279 = vpack.c.b16 %v931, %v927
    %v1280 = vpack.c.b16 %v932, %v928
    %v1281 = vpack.c.b16 %v933, %v929
    %v1282 = vpack.c.b16 %v938, %v934
    %v1283 = vpack.c.b16 %v939, %v935
    %v1284 = vpack.c.b16 %v940, %v936
    %v1285 = vpack.c.b16 %v941, %v937
    %v1286 = vpack.c.b16 %v946, %v942
    %v1287 = vpack.c.b16 %v947, %v943
    %v1288 = vpack.c.b16 %v948, %v944
    %v1289 = vpack.c.b16 %v949, %v945
    %v1290 = vpack.c.b16 %v954, %v950
    %v1291 = vpack.c.b16 %v955, %v951
    %v1292 = vpack.c.b16 %v956, %v952
    %v1293 = vpack.c.b16 %v957, %v953
    %v1294 = vpack.c.b16 %v962, %v958
    %v1295 = vpack.c.b16 %v963, %v959
    %v1296 = vpack.c.b16 %v964, %v960
    %v1297 = vpack.c.b16 %v965, %v961
    %v1298 = vpack.c.b16 %v970, %v966
    %v1299 = vpack.c.b16 %v971, %v967
    %v1300 = vpack.c.b16 %v972, %v968
    %v1301 = vpack.c.b16 %v973, %v969
    %v1302 = vpack.c.b16 %v978, %v974
    %v1303 = vpack.c.b16 %v979, %v975
    %v1304 = vpack.c.b16 %v980, %v976
    %v1305 = vpack.c.b16 %v981, %v977
    %v1306 = vpack.c.b16 %v986, %v982
    %v1307 = vpack.c.b16 %v987, %v983
    %v1308 = vpack.c.b16 %v988, %v984
    %v1309 = vpack.c.b16 %v989, %v985
    %v1310 = vpack.c.b16 %v994, %v990
    %v1311 = vpack.c.b16 %v995, %v991
    %v1312 = vpack.c.b16 %v996, %v992
    %v1313 = vpack.c.b16 %v997, %v993
    %v1314 = vpack.c.b16 %v1002, %v998
    %v1315 = vpack.c.b16 %v1003, %v999
    %v1316 = vpack.c.b16 %v1004, %v1000
    %v1317 = vpack.c.b16 %v1005, %v1001
    %v1318 = vpack.c.b16 %v1010, %v1006
    %v1319 = vpack.c.b16 %v1011, %v1007
    %v1320 = vpack.c.b16 %v1012, %v1008
    %v1321 = vpack.c.b16 %v1013, %v1009
    %v1322 = vpack.c.b16 %v1018, %v1014
    %v1323 = vpack.c.b16 %v1019, %v1015
    %v1324 = vpack.c.b16 %v1020, %v1016
    %v1325 = vpack.c.b16 %v1021, %v1017
    %v1326 = vpack.c.b16 %v1026, %v1022
    %v1327 = vpack.c.b16 %v1027, %v1023
    %v1328 = vpack.c.b16 %v1028, %v1024
    %v1329 = vpack.c.b16 %v1029, %v1025
    %v1330 = vpack.c.b16 %v1034, %v1030
    %v1331 = vpack.c.b16 %v1035, %v1031
    %v1332 = vpack.c.b16 %v1036, %v1032
    %v1333 = vpack.c.b16 %v1037, %v1033
    %v1334 = vpack.c.b16 %v1042, %v1038
    %v1335 = vpack.c.b16 %v1043, %v1039
    %v1336 = vpack.c.b16 %v1044, %v1040
    %v1337 = vpack.c.b16 %v1045, %v1041
    %v1338 = vpack.c.b16 %v1050, %v1046
    %v1339 = vpack.c.b16 %v1051, %v1047
    %v1340 = vpack.c.b16 %v1052, %v1048
    %v1341 = vpack.c.b16 %v1053, %v1049
    %v1342 = vpack.c.b16 %v1058, %v1054
    %v1343 = vpack.c.b16 %v1059, %v1055
    %v1344 = vpack.c.b16 %v1060, %v1056
    %v1345 = vpack.c.b16 %v1061, %v1057
    %v1346 = vpack.c.b16 %v1066, %v1062
    %v1347 = vpack.c.b16 %v1067, %v1063
    %v1348 = vpack.c.b16 %v1068, %v1064
    %v1349 = vpack.c.b16 %v1069, %v1065
    %v1350 = vpack.c.b16 %v1074, %v1070
    %v1351 = vpack.c.b16 %v1075, %v1071
    %v1352 = vpack.c.b16 %v1076, %v1072
    %v1353 = vpack.c.b16 %v1077, %v1073
    %v1354 = vpack.c.b16 %v1082, %v1078
    %v1355 = vpack.c.b16 %v1083, %v1079
    %v1356 = vpack.c.b16 %v1084, %v1080
    %v1357 = vpack.c.b16 %v1085, %v1081
    %v1358 = vpack.c.b16 %v1090, %v1086
    %v1359 = vpack.c.b16 %v1091, %v1087
    %v1360 = vpack.c.b16 %v1092, %v1088
    %v1361 = vpack.c.b16 %v1093, %v1089
    %v1362 = vpack.c.b16 %v1098, %v1094
    %v1363 = vpack.c.b16 %v1099, %v1095
    %v1364 = vpack.c.b16 %v1100, %v1096
    %v1365 = vpack.c.b16 %v1101, %v1097
    %v1366 = vpack.c.b16 %v1106, %v1102
    %v1367 = vpack.c.b16 %v1107, %v1103
    %v1368 = vpack.c.b16 %v1108, %v1104
    %v1369 = vpack.c.b16 %v1109, %v1105
    %v1370 = vpack.c.b16 %v1114, %v1110
    %v1371 = vpack.c.b16 %v1115, %v1111
    %v1372 = vpack.c.b16 %v1116, %v1112
    %v1373 = vpack.c.b16 %v1117, %v1113
    %v1374 = vpack.c.b16 %v1122, %v1118
    %v1375 = vpack.c.b16 %v1123, %v1119
    %v1376 = vpack.c.b16 %v1124, %v1120
    %v1377 = vpack.c.b16 %v1125, %v1121
    %v1378 = vpack.c.b16 %v1130, %v1126
    %v1379 = vpack.c.b16 %v1131, %v1127
    %v1380 = vpack.c.b16 %v1132, %v1128
    %v1381 = vpack.c.b16 %v1133, %v1129
    %v1382 = vpack.c.b16 %v1138, %v1134
    %v1383 = vpack.c.b16 %v1139, %v1135
    %v1384 = vpack.c.b16 %v1140, %v1136
    %v1385 = vpack.c.b16 %v1141, %v1137
    %v1386 = vpack.c.b16 %v1146, %v1142
    %v1387 = vpack.c.b16 %v1147, %v1143
    %v1388 = vpack.c.b16 %v1148, %v1144
    %v1389 = vpack.c.b16 %v1149, %v1145
    %v1390 = vpack.c.b16 %v1154, %v1150
    %v1391 = vpack.c.b16 %v1155, %v1151
    %v1392 = vpack.c.b16 %v1156, %v1152
    %v1393 = vpack.c.b16 %v1157, %v1153
    %v1394 = vpack.c.b16 %v1162, %v1158
    %v1395 = vpack.c.b16 %v1163, %v1159
    %v1396 = vpack.c.b16 %v1164, %v1160
    %v1397 = vpack.c.b16 %v1165, %v1161
    %v1398 = vpack.c.b16 %v1170, %v1166
    %v1399 = vpack.c.b16 %v1171, %v1167
    %v1400 = vpack.c.b16 %v1172, %v1168
    %v1401 = vpack.c.b16 %v1173, %v1169
    %v1402 = vpack.c.b16 %v1178, %v1174
    %v1403 = vpack.c.b16 %v1179, %v1175
    %v1404 = vpack.c.b16 %v1180, %v1176
    %v1405 = vpack.c.b16 %v1181, %v1177
    %v1406 = vpack.c.b16 %v1186, %v1182
    %v1407 = vpack.c.b16 %v1187, %v1183
    %v1408 = vpack.c.b16 %v1188, %v1184
    %v1409 = vpack.c.b16 %v1189, %v1185
    %v1410 = vpack.c.b16 %v1194, %v1190
    %v1411 = vpack.c.b16 %v1195, %v1191
    %v1412 = vpack.c.b16 %v1196, %v1192
    %v1413 = vpack.c.b16 %v1197, %v1193
    %v1414 = vpack.c.b16 %v1202, %v1198
    %v1415 = vpack.c.b16 %v1203, %v1199
    %v1416 = vpack.c.b16 %v1204, %v1200
    %v1417 = vpack.c.b16 %v1205, %v1201
    %v1418 = vpack.c.b16 %v1210, %v1206
    %v1419 = vpack.c.b16 %v1211, %v1207
    %v1420 = vpack.c.b16 %v1212, %v1208
    %v1421 = vpack.c.b16 %v1213, %v1209
    %v1422 = vpack.c.b16 %v1218, %v1214
    %v1423 = vpack.c.b16 %v1219, %v1215
    %v1424 = vpack.c.b16 %v1220, %v1216
    %v1425 = vpack.c.b16 %v1221, %v1217
    %v1426 = vpack.c.b16 %v1226, %v1222
    %v1427 = vpack.c.b16 %v1227, %v1223
    %v1428 = vpack.c.b16 %v1228, %v1224
    %v1429 = vpack.c.b16 %v1229, %v1225
    %v1430 = vpack.c.b16 %v1234, %v1230
    %v1431 = vpack.c.b16 %v1235, %v1231
    %v1432 = vpack.c.b16 %v1236, %v1232
    %v1433 = vpack.c.b16 %v1237, %v1233
    %v1434 = vpack.c.b16 %v1242, %v1238
    %v1435 = vpack.c.b16 %v1243, %v1239
    %v1436 = vpack.c.b16 %v1244, %v1240
    %v1437 = vpack.c.b16 %v1245, %v1241
    %1630 = vmatprep.subr.bf16.mxu0 %v1247
    %1631 = vmatpush1.bf16.msra.mxu0 %v1246
    %1632 = vmatprep.subr.bf16.mxu0 %v1251
    %1633 = vmatpush1.bf16.msra.mxu0 %v1250
    %1634 = vmatprep.subr.bf16.mxu0 %v1255
    %1635 = vmatpush1.bf16.msra.mxu0 %v1254
    %1636 = vmatprep.subr.bf16.mxu0 %v1259
    %1637 = vmatpush1.bf16.msra.mxu0 %v1258
    %1638 = vmatprep.subr.bf16.mxu0 %v1263
    %1639 = vmatpush1.bf16.msra.mxu0 %v1262
    %1640 = vmatprep.subr.bf16.mxu0 %v1267
    %1641 = vmatpush1.bf16.msra.mxu0 %v1266
    %1642 = vmatprep.subr.bf16.mxu0 %v1271
    %1643 = vmatpush1.bf16.msra.mxu0 %v1270
    %1644 = vmatprep.subr.bf16.mxu0 %v1275
    %1645 = vmatpush1.bf16.msra.mxu0 %v1274
    %1646 = vmatprep.subr.bf16.mxu0 %v1279
    %1647 = vmatpush1.bf16.msra.mxu0 %v1278
    %1648 = vmatprep.subr.bf16.mxu0 %v1283
    %1649 = vmatpush1.bf16.msra.mxu0 %v1282
    %1650 = vmatprep.subr.bf16.mxu0 %v1287
    %1651 = vmatpush1.bf16.msra.mxu0 %v1286
    %1652 = vmatprep.subr.bf16.mxu0 %v1291
    %1653 = vmatpush1.bf16.msra.mxu0 %v1290
    %1654 = vmatprep.subr.bf16.mxu0 %v1295
    %1655 = vmatpush1.bf16.msra.mxu0 %v1294
    %1656 = vmatprep.subr.bf16.mxu0 %v1299
    %1657 = vmatpush1.bf16.msra.mxu0 %v1298
    %1658 = vmatprep.subr.bf16.mxu0 %v1303
    %1659 = vmatpush1.bf16.msra.mxu0 %v1302
    %1660 = vmatprep.subr.bf16.mxu0 %v1307
    %1661 = vmatpush1.bf16.msra.mxu0 %v1306
    %1662 = vmatprep.mubr.bf16.mxu0 %v451
    %1663 = vmatmul.mubr.bf16.gmra.mrb[0].mxu0 %v450
    %v1664 = vpop.f32.mrb[0].mxu0
    %v1665 = vadd.f32 %v653, %v1664
    %v1666 = vpop.f32.mrb[0].mxu0
    %v1667 = vadd.f32 %v657, %v1666
    %v1668 = vpop.f32.mrb[0].mxu0
    %v1669 = vpop.f32.mrb[0].mxu0
    %1670 = vdwg.mxu0
    %1671 = vmatprep.subr.bf16.mxu0 %v1311
    %1672 = vmatpush1.bf16.msra.mxu0 %v1310
    %1673 = vmatprep.subr.bf16.mxu0 %v1315
    %1674 = vmatpush1.bf16.msra.mxu0 %v1314
    %1675 = vmatprep.subr.bf16.mxu0 %v1319
    %1676 = vmatpush1.bf16.msra.mxu0 %v1318
    %1677 = vmatprep.subr.bf16.mxu0 %v1323
    %1678 = vmatpush1.bf16.msra.mxu0 %v1322
    %1679 = vmatprep.subr.bf16.mxu0 %v1327
    %1680 = vmatpush1.bf16.msra.mxu0 %v1326
    %1681 = vmatprep.subr.bf16.mxu0 %v1331
    %1682 = vmatpush1.bf16.msra.mxu0 %v1330
    %1683 = vmatprep.subr.bf16.mxu0 %v1335
    %1684 = vmatpush1.bf16.msra.mxu0 %v1334
    %1685 = vmatprep.subr.bf16.mxu0 %v1339
    %1686 = vmatpush1.bf16.msra.mxu0 %v1338
    %1687 = vmatprep.subr.bf16.mxu0 %v1343
    %1688 = vmatpush1.bf16.msra.mxu0 %v1342
    %1689 = vmatprep.subr.bf16.mxu0 %v1347
    %1690 = vmatpush1.bf16.msra.mxu0 %v1346
    %1691 = vmatprep.subr.bf16.mxu0 %v1351
    %1692 = vmatpush1.bf16.msra.mxu0 %v1350
    %1693 = vmatprep.subr.bf16.mxu0 %v1355
    %1694 = vmatpush1.bf16.msra.mxu0 %v1354
    %1695 = vmatprep.subr.bf16.mxu0 %v1359
    %1696 = vmatpush1.bf16.msra.mxu0 %v1358
    %1697 = vmatprep.subr.bf16.mxu0 %v1363
    %1698 = vmatpush1.bf16.msra.mxu0 %v1362
    %1699 = vmatprep.subr.bf16.mxu0 %v1367
    %1700 = vmatpush1.bf16.msra.mxu0 %v1366
    %1701 = vmatprep.subr.bf16.mxu0 %v1371
    %1702 = vmatpush1.bf16.msra.mxu0 %v1370
    %1703 = vmatprep.mubr.bf16.mxu0 %v453
    %1704 = vmatmul.mubr.bf16.gmra.mrb[0].mxu0 %v452
    %v1705 = vpop.f32.mrb[0].mxu0
    %v1706 = vadd.f32 %v1665, %v1705
    %v1707 = vpop.f32.mrb[0].mxu0
    %v1708 = vadd.f32 %v1667, %v1707
    %v1709 = vpop.f32.mrb[0].mxu0
    %v1710 = vpop.f32.mrb[0].mxu0
    %1711 = vdwg.mxu0
    %1712 = vmatprep.subr.bf16.mxu0 %v1375
    %1713 = vmatpush1.bf16.msra.mxu0 %v1374
    %1714 = vmatprep.subr.bf16.mxu0 %v1379
    %1715 = vmatpush1.bf16.msra.mxu0 %v1378
    %1716 = vmatprep.subr.bf16.mxu0 %v1383
    %1717 = vmatpush1.bf16.msra.mxu0 %v1382
    %1718 = vmatprep.subr.bf16.mxu0 %v1387
    %1719 = vmatpush1.bf16.msra.mxu0 %v1386
    %1720 = vmatprep.subr.bf16.mxu0 %v1391
    %1721 = vmatpush1.bf16.msra.mxu0 %v1390
    %1722 = vmatprep.subr.bf16.mxu0 %v1395
    %1723 = vmatpush1.bf16.msra.mxu0 %v1394
    %1724 = vmatprep.subr.bf16.mxu0 %v1399
    %1725 = vmatpush1.bf16.msra.mxu0 %v1398
    %1726 = vmatprep.subr.bf16.mxu0 %v1403
    %1727 = vmatpush1.bf16.msra.mxu0 %v1402
    %1728 = vmatprep.subr.bf16.mxu0 %v1407
    %1729 = vmatpush1.bf16.msra.mxu0 %v1406
    %1730 = vmatprep.subr.bf16.mxu0 %v1411
    %1731 = vmatpush1.bf16.msra.mxu0 %v1410
    %1732 = vmatprep.subr.bf16.mxu0 %v1415
    %1733 = vmatpush1.bf16.msra.mxu0 %v1414
    %1734 = vmatprep.subr.bf16.mxu0 %v1419
    %1735 = vmatpush1.bf16.msra.mxu0 %v1418
    %1736 = vmatprep.subr.bf16.mxu0 %v1423
    %1737 = vmatpush1.bf16.msra.mxu0 %v1422
    %1738 = vmatprep.subr.bf16.mxu0 %v1427
    %1739 = vmatpush1.bf16.msra.mxu0 %v1426
    %1740 = vmatprep.subr.bf16.mxu0 %v1431
    %1741 = vmatpush1.bf16.msra.mxu0 %v1430
    %1742 = vmatprep.subr.bf16.mxu0 %v1435
    %1743 = vmatpush1.bf16.msra.mxu0 %v1434
    %1744 = vmatprep.mubr.bf16.mxu0 %v455
    %1745 = vmatmul.mubr.bf16.gmra.mrb[0].mxu0 %v454
    %v1746 = vpop.f32.mrb[0].mxu0
    %v1747 = vadd.f32 %v1706, %v1746
    %v1748 = vpop.f32.mrb[0].mxu0
    %v1749 = vadd.f32 %v1708, %v1748
    %v1750 = vpop.f32.mrb[0].mxu0
    %v1751 = vpop.f32.mrb[0].mxu0
    %1752 = vdwg.mxu0
    %1753 = vmatprep.subr.bf16.mxu0 %v1249
    %1754 = vmatpush1.bf16.msra.mxu0 %v1248
    %1755 = vmatprep.subr.bf16.mxu0 %v1253
    %1756 = vmatpush1.bf16.msra.mxu0 %v1252
    %1757 = vmatprep.subr.bf16.mxu0 %v1257
    %1758 = vmatpush1.bf16.msra.mxu0 %v1256
    %1759 = vmatprep.subr.bf16.mxu0 %v1261
    %1760 = vmatpush1.bf16.msra.mxu0 %v1260
    %1761 = vmatprep.subr.bf16.mxu0 %v1265
    %1762 = vmatpush1.bf16.msra.mxu0 %v1264
    %1763 = vmatprep.subr.bf16.mxu0 %v1269
    %1764 = vmatpush1.bf16.msra.mxu0 %v1268
    %1765 = vmatprep.subr.bf16.mxu0 %v1273
    %1766 = vmatpush1.bf16.msra.mxu0 %v1272
    %1767 = vmatprep.subr.bf16.mxu0 %v1277
    %1768 = vmatpush1.bf16.msra.mxu0 %v1276
    %1769 = vmatprep.subr.bf16.mxu0 %v1281
    %1770 = vmatpush1.bf16.msra.mxu0 %v1280
    %1771 = vmatprep.subr.bf16.mxu0 %v1285
    %1772 = vmatpush1.bf16.msra.mxu0 %v1284
    %1773 = vmatprep.subr.bf16.mxu0 %v1289
    %1774 = vmatpush1.bf16.msra.mxu0 %v1288
    %1775 = vmatprep.subr.bf16.mxu0 %v1293
    %1776 = vmatpush1.bf16.msra.mxu0 %v1292
    %1777 = vmatprep.subr.bf16.mxu0 %v1297
    %1778 = vmatpush1.bf16.msra.mxu0 %v1296
    %1779 = vmatprep.subr.bf16.mxu0 %v1301
    %1780 = vmatpush1.bf16.msra.mxu0 %v1300
    %1781 = vmatprep.subr.bf16.mxu0 %v1305
    %1782 = vmatpush1.bf16.msra.mxu0 %v1304
    %1783 = vmatprep.subr.bf16.mxu0 %v1309
    %1784 = vmatpush1.bf16.msra.mxu0 %v1308
    %1785 = vmatprep.mubr.bf16.mxu0 %v451
    %1786 = vmatmul.mubr.bf16.gmra.mrb[0].mxu0 %v450
    %v1787 = vpop.f32.mrb[0].mxu0
    %v1788 = vadd.f32 %v661, %v1787
    %v1789 = vpop.f32.mrb[0].mxu0
    %v1790 = vadd.f32 %v665, %v1789
    %v1791 = vpop.f32.mrb[0].mxu0
    %v1792 = vpop.f32.mrb[0].mxu0
    %1793 = vdwg.mxu0
    %1794 = vmatprep.subr.bf16.mxu0 %v1313
    %1795 = vmatpush1.bf16.msra.mxu0 %v1312
    %1796 = vmatprep.subr.bf16.mxu0 %v1317
    %1797 = vmatpush1.bf16.msra.mxu0 %v1316
    %1798 = vmatprep.subr.bf16.mxu0 %v1321
    %1799 = vmatpush1.bf16.msra.mxu0 %v1320
    %1800 = vmatprep.subr.bf16.mxu0 %v1325
    %1801 = vmatpush1.bf16.msra.mxu0 %v1324
    %1802 = vmatprep.subr.bf16.mxu0 %v1329
    %1803 = vmatpush1.bf16.msra.mxu0 %v1328
    %1804 = vmatprep.subr.bf16.mxu0 %v1333
    %1805 = vmatpush1.bf16.msra.mxu0 %v1332
    %1806 = vmatprep.subr.bf16.mxu0 %v1337
    %1807 = vmatpush1.bf16.msra.mxu0 %v1336
    %1808 = vmatprep.subr.bf16.mxu0 %v1341
    %1809 = vmatpush1.bf16.msra.mxu0 %v1340
    %1810 = vmatprep.subr.bf16.mxu0 %v1345
    %1811 = vmatpush1.bf16.msra.mxu0 %v1344
    %1812 = vmatprep.subr.bf16.mxu0 %v1349
    %1813 = vmatpush1.bf16.msra.mxu0 %v1348
    %1814 = vmatprep.subr.bf16.mxu0 %v1353
    %1815 = vmatpush1.bf16.msra.mxu0 %v1352
    %1816 = vmatprep.subr.bf16.mxu0 %v1357
    %1817 = vmatpush1.bf16.msra.mxu0 %v1356
    %1818 = vmatprep.subr.bf16.mxu0 %v1361
    %1819 = vmatpush1.bf16.msra.mxu0 %v1360
    %1820 = vmatprep.subr.bf16.mxu0 %v1365
    %1821 = vmatpush1.bf16.msra.mxu0 %v1364
    %1822 = vmatprep.subr.bf16.mxu0 %v1369
    %1823 = vmatpush1.bf16.msra.mxu0 %v1368
    %1824 = vmatprep.subr.bf16.mxu0 %v1373
    %1825 = vmatpush1.bf16.msra.mxu0 %v1372
    %1826 = vmatprep.mubr.bf16.mxu0 %v453
    %1827 = vmatmul.mubr.bf16.gmra.mrb[0].mxu0 %v452
    %v1828 = vpop.f32.mrb[0].mxu0
    %v1829 = vadd.f32 %v1788, %v1828
    %v1830 = vpop.f32.mrb[0].mxu0
    %v1831 = vadd.f32 %v1790, %v1830
    %v1832 = vpop.f32.mrb[0].mxu0
    %v1833 = vpop.f32.mrb[0].mxu0
    %1834 = vdwg.mxu0
    %1835 = vmatprep.subr.bf16.mxu0 %v1377
    %1836 = vmatpush1.bf16.msra.mxu0 %v1376
    %1837 = vmatprep.subr.bf16.mxu0 %v1381
    %1838 = vmatpush1.bf16.msra.mxu0 %v1380
    %1839 = vmatprep.subr.bf16.mxu0 %v1385
    %1840 = vmatpush1.bf16.msra.mxu0 %v1384
    %1841 = vmatprep.subr.bf16.mxu0 %v1389
    %1842 = vmatpush1.bf16.msra.mxu0 %v1388
    %1843 = vmatprep.subr.bf16.mxu0 %v1393
    %1844 = vmatpush1.bf16.msra.mxu0 %v1392
    %1845 = vmatprep.subr.bf16.mxu0 %v1397
    %1846 = vmatpush1.bf16.msra.mxu0 %v1396
    %1847 = vmatprep.subr.bf16.mxu0 %v1401
    %1848 = vmatpush1.bf16.msra.mxu0 %v1400
    %1849 = vmatprep.subr.bf16.mxu0 %v1405
    %1850 = vmatpush1.bf16.msra.mxu0 %v1404
    %1851 = vmatprep.subr.bf16.mxu0 %v1409
    %1852 = vmatpush1.bf16.msra.mxu0 %v1408
    %1853 = vmatprep.subr.bf16.mxu0 %v1413
    %1854 = vmatpush1.bf16.msra.mxu0 %v1412
    %1855 = vmatprep.subr.bf16.mxu0 %v1417
    %1856 = vmatpush1.bf16.msra.mxu0 %v1416
    %1857 = vmatprep.subr.bf16.mxu0 %v1421
    %1858 = vmatpush1.bf16.msra.mxu0 %v1420
    %1859 = vmatprep.subr.bf16.mxu0 %v1425
    %1860 = vmatpush1.bf16.msra.mxu0 %v1424
    %1861 = vmatprep.subr.bf16.mxu0 %v1429
    %1862 = vmatpush1.bf16.msra.mxu0 %v1428
    %1863 = vmatprep.subr.bf16.mxu0 %v1433
    %1864 = vmatpush1.bf16.msra.mxu0 %v1432
    %1865 = vmatprep.subr.bf16.mxu0 %v1437
    %1866 = vmatpush1.bf16.msra.mxu0 %v1436
    %1867 = vmatprep.mubr.bf16.mxu0 %v455
    %1868 = vmatmul.mubr.bf16.gmra.mrb[0].mxu0 %v454
    %v1869 = vpop.f32.mrb[0].mxu0
    %v1870 = vadd.f32 %v1829, %v1869
    %v1871 = vpop.f32.mrb[0].mxu0
    %v1872 = vadd.f32 %v1831, %v1871
    %v1873 = vpop.f32.mrb[0].mxu0
    %v1874 = vpop.f32.mrb[0].mxu0
    %1875 = vdwg.mxu0
    %v1876 = vmax.f32 %v1747, 0.0
    %v1877 = vmax.f32 %v1749, 0.0
    %v1878 = vmax.f32 %v1870, 0.0
    %v1879 = vmax.f32 %v1872, 0.0
    %v1880 = vpack.c.bf16 %v1876, %v1876
    %v1881 = vpack.c.bf16 %v1877, %v1877
    %v1882 = vpack.c.bf16 %v1878, %v1878
    %v1883 = vpack.c.bf16 %v1879, %v1879
    %v1884 = vld [vmem:[#allocation8] sm:$0xf]
    %v1885 = vld [vmem:[#allocation8 + $0x4] sm:$0xf]
    %v1886 = vld [vmem:[#allocation8 + $0x8] sm:$0xf]
    %v1887 = vld [vmem:[#allocation8 + $0xc] sm:$0xf]
    %v1888 = vld [vmem:[#allocation8 + $0x10] sm:$0xf]
    %v1889 = vld [vmem:[#allocation8 + $0x14] sm:$0xf]
    %v1890 = vld [vmem:[#allocation8 + $0x18] sm:$0xf]
    %v1891 = vld [vmem:[#allocation8 + $0x1c] sm:$0xf]
    %v1892 = vld [vmem:[#allocation8 + $0x20] sm:$0xf]
    %v1893 = vld [vmem:[#allocation8 + $0x24] sm:$0xf]
    %v1894 = vld [vmem:[#allocation8 + $0x28] sm:$0xf]
    %v1895 = vld [vmem:[#allocation8 + $0x2c] sm:$0xf]
    %v1896 = vld [vmem:[#allocation8 + $0x30] sm:$0xf]
    %v1897 = vld [vmem:[#allocation8 + $0x34] sm:$0xf]
    %v1898 = vld [vmem:[#allocation8 + $0x38] sm:$0xf]
    %v1899 = vld [vmem:[#allocation8 + $0x3c] sm:$0xf]
    %v1900 = vld [vmem:[#allocation8 + $0x40] sm:$0xf]
    %v1901 = vld [vmem:[#allocation8 + $0x44] sm:$0xf]
    %v1902 = vld [vmem:[#allocation8 + $0x48] sm:$0xf]
    %v1903 = vld [vmem:[#allocation8 + $0x4c] sm:$0xf]
    %v1904 = vld [vmem:[#allocation8 + $0x50] sm:$0xf]
    %v1905 = vld [vmem:[#allocation8 + $0x54] sm:$0xf]
    %v1906 = vld [vmem:[#allocation8 + $0x58] sm:$0xf]
    %v1907 = vld [vmem:[#allocation8 + $0x5c] sm:$0xf]
    %v1908 = vld [vmem:[#allocation8 + $0x60] sm:$0xf]
    %v1909 = vld [vmem:[#allocation8 + $0x64] sm:$0xf]
    %v1910 = vld [vmem:[#allocation8 + $0x68] sm:$0xf]
    %v1911 = vld [vmem:[#allocation8 + $0x6c] sm:$0xf]
    %v1912 = vld [vmem:[#allocation8 + $0x70] sm:$0xf]
    %v1913 = vld [vmem:[#allocation8 + $0x74] sm:$0xf]
    %v1914 = vld [vmem:[#allocation8 + $0x78] sm:$0xf]
    %v1915 = vld [vmem:[#allocation8 + $0x7c] sm:$0xf]
    %v1916 = vld [vmem:[#allocation8 + $0x80] sm:$0xf]
    %v1917 = vld [vmem:[#allocation8 + $0x84] sm:$0xf]
    %v1918 = vld [vmem:[#allocation8 + $0x88] sm:$0xf]
    %v1919 = vld [vmem:[#allocation8 + $0x8c] sm:$0xf]
    %v1920 = vld [vmem:[#allocation8 + $0x90] sm:$0xf]
    %v1921 = vld [vmem:[#allocation8 + $0x94] sm:$0xf]
    %v1922 = vld [vmem:[#allocation8 + $0x98] sm:$0xf]
    %v1923 = vld [vmem:[#allocation8 + $0x9c] sm:$0xf]
    %v1924 = vld [vmem:[#allocation8 + $0xa0] sm:$0xf]
    %v1925 = vld [vmem:[#allocation8 + $0xa4] sm:$0xf]
    %v1926 = vld [vmem:[#allocation8 + $0xa8] sm:$0xf]
    %v1927 = vld [vmem:[#allocation8 + $0xac] sm:$0xf]
    %v1928 = vld [vmem:[#allocation8 + $0xb0] sm:$0xf]
    %v1929 = vld [vmem:[#allocation8 + $0xb4] sm:$0xf]
    %v1930 = vld [vmem:[#allocation8 + $0xb8] sm:$0xf]
    %v1931 = vld [vmem:[#allocation8 + $0xbc] sm:$0xf]
    %v1932 = vld [vmem:[#allocation8 + $0xc0] sm:$0xf]
    %v1933 = vld [vmem:[#allocation8 + $0xc4] sm:$0xf]
    %v1934 = vld [vmem:[#allocation8 + $0xc8] sm:$0xf]
    %v1935 = vld [vmem:[#allocation8 + $0xcc] sm:$0xf]
    %v1936 = vld [vmem:[#allocation8 + $0xd0] sm:$0xf]
    %v1937 = vld [vmem:[#allocation8 + $0xd4] sm:$0xf]
    %v1938 = vld [vmem:[#allocation8 + $0xd8] sm:$0xf]
    %v1939 = vld [vmem:[#allocation8 + $0xdc] sm:$0xf]
    %v1940 = vld [vmem:[#allocation8 + $0xe0] sm:$0xf]
    %v1941 = vld [vmem:[#allocation8 + $0xe4] sm:$0xf]
    %v1942 = vld [vmem:[#allocation8 + $0xe8] sm:$0xf]
    %v1943 = vld [vmem:[#allocation8 + $0xec] sm:$0xf]
    %v1944 = vld [vmem:[#allocation8 + $0xf0] sm:$0xf]
    %v1945 = vld [vmem:[#allocation8 + $0xf4] sm:$0xf]
    %v1946 = vld [vmem:[#allocation8 + $0xf8] sm:$0xf]
    %v1947 = vld [vmem:[#allocation8 + $0xfc] sm:$0xf]
    %v1948 = vld [vmem:[%s6] sm:$0x1]
    %v1950 = vlaneseq
    %v1951 = vshrl.u32 %v1950, 7
    %v1952 = vsub.s32 0, %v1951
    %v1953 = vrot.slane %v1948, %v1952
    %v2019 = vunpack.c.l.b16 %v1884
    %v2020 = vunpack.c.l.b16 %v1885
    %v2021 = vunpack.c.l.b16 %v1886
    %v2022 = vunpack.c.l.b16 %v1887
    %v2023 = vunpack.c.l.b16 %v1888
    %v2024 = vunpack.c.l.b16 %v1889
    %v2025 = vunpack.c.l.b16 %v1890
    %v2026 = vunpack.c.l.b16 %v1891
    %v2027 = vunpack.c.l.b16 %v1892
    %v2028 = vunpack.c.l.b16 %v1893
    %v2029 = vunpack.c.l.b16 %v1894
    %v2030 = vunpack.c.l.b16 %v1895
    %v2031 = vunpack.c.l.b16 %v1896
    %v2032 = vunpack.c.l.b16 %v1897
    %v2033 = vunpack.c.l.b16 %v1898
    %v2034 = vunpack.c.l.b16 %v1899
    %v2035 = vunpack.c.l.b16 %v1900
    %v2036 = vunpack.c.l.b16 %v1901
    %v2037 = vunpack.c.l.b16 %v1902
    %v2038 = vunpack.c.l.b16 %v1903
    %v2039 = vunpack.c.l.b16 %v1904
    %v2040 = vunpack.c.l.b16 %v1905
    %v2041 = vunpack.c.l.b16 %v1906
    %v2042 = vunpack.c.l.b16 %v1907
    %v2043 = vunpack.c.l.b16 %v1908
    %v2044 = vunpack.c.l.b16 %v1909
    %v2045 = vunpack.c.l.b16 %v1910
    %v2046 = vunpack.c.l.b16 %v1911
    %v2047 = vunpack.c.l.b16 %v1912
    %v2048 = vunpack.c.l.b16 %v1913
    %v2049 = vunpack.c.l.b16 %v1914
    %v2050 = vunpack.c.l.b16 %v1915
    %v2051 = vunpack.c.l.b16 %v1916
    %v2052 = vunpack.c.l.b16 %v1917
    %v2053 = vunpack.c.l.b16 %v1918
    %v2054 = vunpack.c.l.b16 %v1919
    %v2055 = vunpack.c.l.b16 %v1920
    %v2056 = vunpack.c.l.b16 %v1921
    %v2057 = vunpack.c.l.b16 %v1922
    %v2058 = vunpack.c.l.b16 %v1923
    %v2059 = vunpack.c.l.b16 %v1924
    %v2060 = vunpack.c.l.b16 %v1925
    %v2061 = vunpack.c.l.b16 %v1926
    %v2062 = vunpack.c.l.b16 %v1927
    %v2063 = vunpack.c.l.b16 %v1928
    %v2064 = vunpack.c.l.b16 %v1929
    %v2065 = vunpack.c.l.b16 %v1930
    %v2066 = vunpack.c.l.b16 %v1931
    %v2067 = vunpack.c.l.b16 %v1932
    %v2068 = vunpack.c.l.b16 %v1933
    %v2069 = vunpack.c.l.b16 %v1934
    %v2070 = vunpack.c.l.b16 %v1935
    %v2071 = vunpack.c.l.b16 %v1936
    %v2072 = vunpack.c.l.b16 %v1937
    %v2073 = vunpack.c.l.b16 %v1938
    %v2074 = vunpack.c.l.b16 %v1939
    %v2075 = vunpack.c.l.b16 %v1940
    %v2076 = vunpack.c.l.b16 %v1941
    %v2077 = vunpack.c.l.b16 %v1942
    %v2078 = vunpack.c.l.b16 %v1943
    %v2079 = vunpack.c.l.b16 %v1944
    %v2080 = vunpack.c.l.b16 %v1945
    %v2081 = vunpack.c.l.b16 %v1946
    %v2082 = vunpack.c.l.b16 %v1947
    %v2083 = vpack.c.b16 %v2020, %v2019
    %v2084 = vpack.c.b16 %v2022, %v2021
    %v2085 = vpack.c.b16 %v2024, %v2023
    %v2086 = vpack.c.b16 %v2026, %v2025
    %v2087 = vpack.c.b16 %v2028, %v2027
    %v2088 = vpack.c.b16 %v2030, %v2029
    %v2089 = vpack.c.b16 %v2032, %v2031
    %v2090 = vpack.c.b16 %v2034, %v2033
    %v2091 = vpack.c.b16 %v2036, %v2035
    %v2092 = vpack.c.b16 %v2038, %v2037
    %v2093 = vpack.c.b16 %v2040, %v2039
    %v2094 = vpack.c.b16 %v2042, %v2041
    %v2095 = vpack.c.b16 %v2044, %v2043
    %v2096 = vpack.c.b16 %v2046, %v2045
    %v2097 = vpack.c.b16 %v2048, %v2047
    %v2098 = vpack.c.b16 %v2050, %v2049
    %v2099 = vpack.c.b16 %v2052, %v2051
    %v2100 = vpack.c.b16 %v2054, %v2053
    %v2101 = vpack.c.b16 %v2056, %v2055
    %v2102 = vpack.c.b16 %v2058, %v2057
    %v2103 = vpack.c.b16 %v2060, %v2059
    %v2104 = vpack.c.b16 %v2062, %v2061
    %v2105 = vpack.c.b16 %v2064, %v2063
    %v2106 = vpack.c.b16 %v2066, %v2065
    %v2107 = vpack.c.b16 %v2068, %v2067
    %v2108 = vpack.c.b16 %v2070, %v2069
    %v2109 = vpack.c.b16 %v2072, %v2071
    %v2110 = vpack.c.b16 %v2074, %v2073
    %v2111 = vpack.c.b16 %v2076, %v2075
    %v2112 = vpack.c.b16 %v2078, %v2077
    %v2113 = vpack.c.b16 %v2080, %v2079
    %v2114 = vpack.c.b16 %v2082, %v2081
    %2147 = vmatprep.subr.bf16.mxu0 0
    %2148 = vmatpush1.bf16.msra.mxu0 %v2083
    %2149 = vmatprep.subr.bf16.mxu0 0
    %2150 = vmatpush1.bf16.msra.mxu0 %v2084
    %2151 = vmatprep.subr.bf16.mxu0 0
    %2152 = vmatpush1.bf16.msra.mxu0 %v2085
    %2153 = vmatprep.subr.bf16.mxu0 0
    %2154 = vmatpush1.bf16.msra.mxu0 %v2086
    %2155 = vmatprep.subr.bf16.mxu0 0
    %2156 = vmatpush1.bf16.msra.mxu0 %v2087
    %2157 = vmatprep.subr.bf16.mxu0 0
    %2158 = vmatpush1.bf16.msra.mxu0 %v2088
    %2159 = vmatprep.subr.bf16.mxu0 0
    %2160 = vmatpush1.bf16.msra.mxu0 %v2089
    %2161 = vmatprep.subr.bf16.mxu0 0
    %2162 = vmatpush1.bf16.msra.mxu0 %v2090
    %2163 = vmatprep.subr.bf16.mxu0 0
    %2164 = vmatpush1.bf16.msra.mxu0 %v2091
    %2165 = vmatprep.subr.bf16.mxu0 0
    %2166 = vmatpush1.bf16.msra.mxu0 %v2092
    %2167 = vmatprep.subr.bf16.mxu0 0
    %2168 = vmatpush1.bf16.msra.mxu0 %v2093
    %2169 = vmatprep.subr.bf16.mxu0 0
    %2170 = vmatpush1.bf16.msra.mxu0 %v2094
    %2171 = vmatprep.subr.bf16.mxu0 0
    %2172 = vmatpush1.bf16.msra.mxu0 %v2095
    %2173 = vmatprep.subr.bf16.mxu0 0
    %2174 = vmatpush1.bf16.msra.mxu0 %v2096
    %2175 = vmatprep.subr.bf16.mxu0 0
    %2176 = vmatpush1.bf16.msra.mxu0 %v2097
    %2177 = vmatprep.subr.bf16.mxu0 0
    %2178 = vmatpush1.bf16.msra.mxu0 %v2098
    %2179 = vmatprep.mubr.bf16.mxu0 %v1881
    %2180 = vmatmul.mubr.bf16.gmra.mrb[0].mxu0 %v1880
    %v2181 = vpop.f32.mrb[0].mxu0
    %v2182 = vadd.f32 %v1953, %v2181
    %v2183 = vpop.f32.mrb[0].mxu0
    %v2184 = vpop.f32.mrb[0].mxu0
    %v2185 = vpop.f32.mrb[0].mxu0
    %2186 = vdwg.mxu0
    %2187 = vmatprep.subr.bf16.mxu0 0
    %2188 = vmatpush1.bf16.msra.mxu0 %v2099
    %2189 = vmatprep.subr.bf16.mxu0 0
    %2190 = vmatpush1.bf16.msra.mxu0 %v2100
    %2191 = vmatprep.subr.bf16.mxu0 0
    %2192 = vmatpush1.bf16.msra.mxu0 %v2101
    %2193 = vmatprep.subr.bf16.mxu0 0
    %2194 = vmatpush1.bf16.msra.mxu0 %v2102
    %2195 = vmatprep.subr.bf16.mxu0 0
    %2196 = vmatpush1.bf16.msra.mxu0 %v2103
    %2197 = vmatprep.subr.bf16.mxu0 0
    %2198 = vmatpush1.bf16.msra.mxu0 %v2104
    %2199 = vmatprep.subr.bf16.mxu0 0
    %2200 = vmatpush1.bf16.msra.mxu0 %v2105
    %2201 = vmatprep.subr.bf16.mxu0 0
    %2202 = vmatpush1.bf16.msra.mxu0 %v2106
    %2203 = vmatprep.subr.bf16.mxu0 0
    %2204 = vmatpush1.bf16.msra.mxu0 %v2107
    %2205 = vmatprep.subr.bf16.mxu0 0
    %2206 = vmatpush1.bf16.msra.mxu0 %v2108
    %2207 = vmatprep.subr.bf16.mxu0 0
    %2208 = vmatpush1.bf16.msra.mxu0 %v2109
    %2209 = vmatprep.subr.bf16.mxu0 0
    %2210 = vmatpush1.bf16.msra.mxu0 %v2110
    %2211 = vmatprep.subr.bf16.mxu0 0
    %2212 = vmatpush1.bf16.msra.mxu0 %v2111
    %2213 = vmatprep.subr.bf16.mxu0 0
    %2214 = vmatpush1.bf16.msra.mxu0 %v2112
    %2215 = vmatprep.subr.bf16.mxu0 0
    %2216 = vmatpush1.bf16.msra.mxu0 %v2113
    %2217 = vmatprep.subr.bf16.mxu0 0
    %2218 = vmatpush1.bf16.msra.mxu0 %v2114
    %2219 = vmatprep.mubr.bf16.mxu0 %v1883
    %2220 = vmatmul.mubr.bf16.gmra.mrb[0].mxu0 %v1882
    %v2221 = vpop.f32.mrb[0].mxu0
    %v2222 = vadd.f32 %v2182, %v2221
    %v2223 = vpop.f32.mrb[0].mxu0
    %v2224 = vpop.f32.mrb[0].mxu0
    %v2225 = vpop.f32.mrb[0].mxu0
    %2226 = vdwg.mxu0
    %v2227 = vmax.f32 %v2222, 0.0
    %v2228 = vpack.c.bf16 %v2227, %v2227
    %v2229 = vld [vmem:[#allocation10] sm:$0xf]
    %v2230 = vld [vmem:[#allocation10 + $0x4] sm:$0xf]
    %v2231 = vld [vmem:[#allocation10 + $0x8] sm:$0xf]
    %v2232 = vld [vmem:[#allocation10 + $0xc] sm:$0xf]
    %v2233 = vld [vmem:[#allocation10 + $0x10] sm:$0xf]
    %v2234 = vld [vmem:[#allocation10 + $0x14] sm:$0xf]
    %v2235 = vld [vmem:[#allocation10 + $0x18] sm:$0xf]
    %v2236 = vld [vmem:[#allocation10 + $0x1c] sm:$0xf]
    %v2237 = vld [vmem:[#allocation10 + $0x20] sm:$0xf]
    %v2238 = vld [vmem:[#allocation10 + $0x24] sm:$0xf]
    %v2239 = vld [vmem:[#allocation10 + $0x28] sm:$0xf]
    %v2240 = vld [vmem:[#allocation10 + $0x2c] sm:$0xf]
    %v2241 = vld [vmem:[#allocation10 + $0x30] sm:$0xf]
    %v2242 = vld [vmem:[#allocation10 + $0x34] sm:$0xf]
    %v2243 = vld [vmem:[#allocation10 + $0x38] sm:$0xf]
    %v2244 = vld [vmem:[#allocation10 + $0x3c] sm:$0xf]
    %v2245 = vld [vmem:[%s8] sm:$0x1]
    %v2247 = vlaneseq
    %v2248 = vshrl.u32 %v2247, 7
    %v2249 = vsub.s32 0, %v2248
    %v2250 = vrot.slane %v2245, %v2249
    %v2268 = vunpack.c.l.b16 %v2229
    %v2269 = vunpack.c.l.b16 %v2230
    %v2270 = vunpack.c.l.b16 %v2231
    %v2271 = vunpack.c.l.b16 %v2232
    %v2272 = vunpack.c.l.b16 %v2233
    %v2273 = vunpack.c.l.b16 %v2234
    %v2274 = vunpack.c.l.b16 %v2235
    %v2275 = vunpack.c.l.b16 %v2236
    %v2276 = vunpack.c.l.b16 %v2237
    %v2277 = vunpack.c.l.b16 %v2238
    %v2278 = vunpack.c.l.b16 %v2239
    %v2279 = vunpack.c.l.b16 %v2240
    %v2280 = vunpack.c.l.b16 %v2241
    %v2281 = vunpack.c.l.b16 %v2242
    %v2282 = vunpack.c.l.b16 %v2243
    %v2283 = vunpack.c.l.b16 %v2244
    %v2284 = vpack.c.b16 %v2269, %v2268
    %v2285 = vpack.c.b16 %v2271, %v2270
    %v2286 = vpack.c.b16 %v2273, %v2272
    %v2287 = vpack.c.b16 %v2275, %v2274
    %v2288 = vpack.c.b16 %v2277, %v2276
    %v2289 = vpack.c.b16 %v2279, %v2278
    %v2290 = vpack.c.b16 %v2281, %v2280
    %v2291 = vpack.c.b16 %v2283, %v2282
    %2300 = vmatprep.subr.bf16.mxu0 0
    %2301 = vmatpush1.bf16.msra.mxu0 %v2284
    %2302 = vmatprep.subr.bf16.mxu0 0
    %2303 = vmatpush1.bf16.msra.mxu0 %v2285
    %2304 = vmatprep.subr.bf16.mxu0 0
    %2305 = vmatpush1.bf16.msra.mxu0 %v2286
    %2306 = vmatprep.subr.bf16.mxu0 0
    %2307 = vmatpush1.bf16.msra.mxu0 %v2287
    %2308 = vmatprep.subr.bf16.mxu0 0
    %2309 = vmatpush1.bf16.msra.mxu0 %v2288
    %2310 = vmatprep.subr.bf16.mxu0 0
    %2311 = vmatpush1.bf16.msra.mxu0 %v2289
    %2312 = vmatprep.subr.bf16.mxu0 0
    %2313 = vmatpush1.bf16.msra.mxu0 %v2290
    %2314 = vmatprep.subr.bf16.mxu0 0
    %2315 = vmatpush1.bf16.msra.mxu0 %v2291
    %2316 = vmatprep.subr.bf16.mxu0 0
    %2317 = vmatpush1.bf16.msra.mxu0 0
    %2318 = vmatprep.subr.bf16.mxu0 0
    %2319 = vmatpush1.bf16.msra.mxu0 0
    %2320 = vmatprep.subr.bf16.mxu0 0
    %2321 = vmatpush1.bf16.msra.mxu0 0
    %2322 = vmatprep.subr.bf16.mxu0 0
    %2323 = vmatpush1.bf16.msra.mxu0 0
    %2324 = vmatprep.subr.bf16.mxu0 0
    %2325 = vmatpush1.bf16.msra.mxu0 0
    %2326 = vmatprep.subr.bf16.mxu0 0
    %2327 = vmatpush1.bf16.msra.mxu0 0
    %2328 = vmatprep.subr.bf16.mxu0 0
    %2329 = vmatpush1.bf16.msra.mxu0 0
    %2330 = vmatprep.subr.bf16.mxu0 0
    %2331 = vmatpush1.bf16.msra.mxu0 0
    %2332 = vmatprep.mubr.bf16.mxu0 0
    %2333 = vmatmul.mubr.bf16.gmra.mrb[0].mxu0 %v2228
    %v2334 = vpop.f32.mrb[0].mxu0
    %v2335 = vadd.f32 %v2250, %v2334
    %v2336 = vpop.f32.mrb[0].mxu0
    %v2337 = vpop.f32.mrb[0].mxu0
    %v2338 = vpop.f32.mrb[0].mxu0
    %2339 = vdwg.mxu0
    %2340 = vst [vmem:[#allocation11] sm:$0xff] %v2335
    // Predicated region
    $region58: #{tpu_custom_call.1} parent=1 // pred_check
      _
    $region59: #{tpu_custom_call.1} parent=1 // pred_check_branch
      %2342 = sbr.rel (0) target = $region61
    $region60: #{tpu_custom_call.1} parent=1 // pred_region
      %s2344 = ssub.s32 128, 128
      %2345 = vsyncadd [#allocation4], %s2344
      %s2347 = sshll.u32 [#allocation11], 4
      %s2348 = int_to_ptr.vmem [resolvable:$true] %s2347
      %2350 = dma.vmem_to_hbm [thread:$0]  %s2348, 128, %s9, [#allocation4]
    $region61: #{tpu_custom_call.1} parent=1 // pred_fallthru
      _
    // Predicated region
    $region62: #{tpu_custom_call.1} parent=1 // pred_check
      _
    $region63: #{tpu_custom_call.1} parent=1 // pred_check_branch
      %2352 = sbr.rel (0) target = $region65
    $region64: #{tpu_custom_call.1} parent=1 // pred_region
      %2353 = dma.done [#allocation4], 128
    $region65: #{tpu_custom_call.1} parent=1 // pred_fallthru
      _
    %2354 = vsyncpa [#allocation3], 1
    %2355 = vsyncpa [#allocation6], 1
    %2356 = vsyncpa [#allocation9], 1
    %2357 = vsyncpa [#allocation4], 1

</llo_original>
